<compile_context>
chip_gen: v6e
topology: v6e:2x2x1
jax: 0.10.0
libtpu: 0.0.40
codegen_flags: <defaults>
</compile_context>

<pallas_src>
import functools

import jax
import jax.numpy as jnp
from jax.experimental import pallas as pl
from jax.experimental.pallas import tpu as pltpu

UPSCALE = 2          # nn.PixelShuffle(upscale_factor=2)
PRELU_INIT = 0.25    # nn.PReLU() default init


# ---------------------------------------------------------------------------
# Pallas kernel: fused 3x3 conv (single deep-K matmul) + bias + PReLU
# ---------------------------------------------------------------------------
def _conv_bias_prelu_kernel(xp_ref, w_ref, b_ref, a_ref, o_ref, lhs_ref, *,
                            tile_h, W, Cin, Cout):
    """One (batch, row-tile) grid step.

    xp_ref : (1, H+2, W+2, Cin)   bf16  zero-padded NHWC slab (whole image,
                                        VMEM-resident across the row-tile axis)
    w_ref  : (9*Cin, Cout)        bf16  conv weights, row = (di*3+dj)*Cin + c
    b_ref  : (1, Cout)            f32   conv bias
    a_ref  : (1,)                 f32   PReLU parameter (SMEM scalar)
    o_ref  : (1, tile_h*W, Cout)  f32   conv+bias+PReLU for rows
                                        [t*tile_h, (t+1)*tile_h), channels last
    lhs_ref: (tile_h*W, 9*Cin)    bf16  VMEM scratch: im2col LHS tile
    """
    t = pl.program_id(1)
    row0 = pl.multiple_of(t * tile_h, tile_h)
    M = tile_h * W

    # Gather the 9 shifted windows straight from the VMEM-resident padded slab
    # into one contiguous (M, 9*Cin) im2col tile (built once per grid step,
    # no 9x detached slice/reshape temporaries feeding separate matmuls).
    for di in range(3):
        for dj in range(3):
            tap = di * 3 + dj
            win = xp_ref[0, pl.ds(row0 + di, tile_h), dj:dj + W, :]
            lhs_ref[:, tap * Cin:(tap + 1) * Cin] = win.reshape(M, Cin)

    # Single deep-K MXU matmul: (M, 576) x (576, 256), f32 accumulation.
    acc = jnp.dot(lhs_ref[...], w_ref[...], preferred_element_type=jnp.float32)

    y = acc + b_ref[...]                     # bias (broadcast over rows)
    a = a_ref[0]                             # PReLU scalar from SMEM
    # PReLU is elementwise and commutes with the PixelShuffle permutation
    # applied outside the kernel.
    o_ref[0] = jnp.where(y >= 0.0, y, a * y)


# ---------------------------------------------------------------------------
# Row-tile size: largest divisor of H whose f32 output tile fits the budget,
# preferring >= 2 row tiles (pipeline depth / v7x megacore balance).
# ---------------------------------------------------------------------------
def _choose_tile_h(H, W, cout, target_out_bytes=2 * 1024 * 1024):
    cap = max(1, target_out_bytes // (W * cout * 4))
    best = None
    for th in range(min(H, cap), 0, -1):
        if H % th:
            continue
        # (8, 128) BlockSpec constraint on the (tile_h*W, Cout) output block.
        if (th * W) % 8 != 0 and (th * W) != (H * W):
            continue
        if best is None:
            best = th                      # largest valid tile (fallback)
        if H // th >= 2:
            return th                      # prefer >= 2 row tiles
    return best if best is not None else H


# ---------------------------------------------------------------------------
# Forward pass (matches UpsamplingBlock.forward, NCHW in / NCHW out)
# ---------------------------------------------------------------------------
def upsampling_block_forward(params, x_nchw, *, tile_h=None):
    """x_nchw: (N, 64, H, W) f32 -> (N, 64, 2H, 2W) f32."""
    w, b, a = params["w"], params["b"], params["a"]
    N, Cin, H, W = x_nchw.shape
    Cout = w.shape[-1]
    r = UPSCALE
    Cps = Cout // (r * r)

    tH = _choose_tile_h(H, W, Cout) if tile_h is None else tile_h
    if H % tH:
        raise ValueError(f"tile_h={tH} must divide H={H}")
    nT = H // tH
    M = tH * W
    K = 9 * Cin

    # NCHW -> NHWC, zero pad (padding=1), cast activations to bf16 once.
    x = jnp.transpose(x_nchw, (0, 2, 3, 1))
    xp = jnp.pad(x, ((0, 0), (1, 1), (1, 1), (0, 0))).astype(jnp.bfloat16)
    # TODO(synk): fold the zero padding into the kernel (mask the border taps)
    # to save one extra XLA read/write pass over the activations.

    # HWIO weights -> (9*Cin, Cout) so the conv is ONE deep-K matmul per tile.
    w_b16 = w.reshape(K, Cout).astype(jnp.bfloat16)
    b2 = b.reshape(1, Cout).astype(jnp.float32)
    a1 = jnp.asarray(a, jnp.float32).reshape(1)

    flops = 2 * N * H * W * K * Cout
    bytes_accessed = (xp.size * 2 + w_b16.size * 2 + b2.size * 4 + 4
                      + N * H * W * Cout * 4)

    y = pl.pallas_call(
        functools.partial(_conv_bias_prelu_kernel,
                          tile_h=tH, W=W, Cin=Cin, Cout=Cout),
        out_shape=jax.ShapeDtypeStruct((N, H * W, Cout), jnp.float32),
        grid=(N, nT),
        in_specs=[
            # Whole padded image; index_map ignores the row-tile index t, so
            # the slab is DMA'd once per batch element and stays VMEM-resident.
            pl.BlockSpec((1, H + 2, W + 2, Cin), lambda n, t: (n, 0, 0, 0)),
            pl.BlockSpec((K, Cout), lambda n, t: (0, 0)),
            pl.BlockSpec((1, Cout), lambda n, t: (0, 0)),
            pl.BlockSpec(memory_space=pltpu.MemorySpace.SMEM),   # PReLU scalar
        ],
        out_specs=pl.BlockSpec((1, M, Cout), lambda n, t: (n, t, 0)),
        scratch_shapes=[pltpu.VMEM((M, K), jnp.bfloat16)],       # im2col tile
        compiler_params=pltpu.CompilerParams(
            dimension_semantics=("parallel", "arbitrary"),
            vmem_limit_bytes=32 * 1024 * 1024,    # small footprint; v7x-safe
        ),
        cost_estimate=pl.CostEstimate(
            flops=flops, transcendentals=0, bytes_accessed=bytes_accessed),
    )(xp, w_b16, b2, a1)

    # PixelShuffle(2) + NHWC->NCHW fused into one XLA transpose of the small,
    # lane-dense kernel output.  ch = c*r*r + i*r + j -> out[n, c, 2h+i, 2w+j].
    y = y.reshape(N, H, W, Cps, r, r)
    out = jnp.transpose(y, (0, 3, 1, 4, 2, 5)).reshape(N, Cps, H * r, W * r)
    return out


# ---------------------------------------------------------------------------
# Pure-JAX f32 reference (for correctness verification only)
# ---------------------------------------------------------------------------
def _reference_forward(params, x_nchw):
    w, b, a = params["w"], params["b"], params["a"]
    N, Cin, H, W = x_nchw.shape
    Cout = w.shape[-1]
    r = UPSCALE
    Cps = Cout // (r * r)
    x = jnp.transpose(x_nchw, (0, 2, 3, 1))
    y = jax.lax.conv_general_dilated(
        x, w, window_strides=(1, 1), padding=((1, 1), (1, 1)),
        dimension_numbers=("NHWC", "HWIO", "NHWC"))
    y = y + b.reshape(1, 1, 1, Cout)
    y = y.reshape(N, H, W, Cps, r, r)
    y = jnp.transpose(y, (0, 3, 1, 4, 2, 5)).reshape(N, Cps, H * r, W * r)
    return jnp.where(y >= 0.0, y, jnp.reshape(a, (1, 1, 1, 1)) * y)


if __name__ == "__main__":
    key = jax.random.PRNGKey(0)
    kw, kb, kx = jax.random.split(key, 3)

    # Module fixes Cin=64, Cout=256; small spatial size / batch for the test.
    N, Cin, H, W, Cout = 2, 64, 16, 16, 256
    params = {
        "w": 0.05 * jax.random.normal(kw, (3, 3, Cin, Cout), jnp.float32),
        "b": 0.01 * jax.random.normal(kb, (Cout,), jnp.float32),
        "a": jnp.full((1,), PRELU_INIT, jnp.float32),   # nn.PReLU() default
    }
    x = jax.random.normal(kx, (N, Cin, H, W), jnp.float32)

    fwd = jax.jit(upsampling_block_forward)
    out = jax.block_until_ready(fwd(params, x))

    assert out.shape == (N, Cout // (UPSCALE * UPSCALE), H * UPSCALE, W * UPSCALE)
    assert bool(jnp.all(jnp.isfinite(out)))

    ref = jax.block_until_ready(jax.jit(_reference_forward)(params, x))
    max_err = float(jnp.max(jnp.abs(out - ref)))
    assert max_err < 1e-1, f"max abs error vs reference: {max_err}"

    print("KERNEL_OK")
</pallas_src>

<mosaic_0001>
module attributes {stable_mosaic.version = 11 : i64} {
  func.func @_conv_bias_prelu_kernel(%arg0: i32, %arg1: i32, %arg2: memref<1x18x18x64xbf16, #tpu.memory_space<vmem>>, %arg3: memref<576x256xbf16, #tpu.memory_space<vmem>>, %arg4: memref<1x256xf32, #tpu.memory_space<vmem>>, %arg5: memref<1xf32, #tpu.memory_space<smem>>, %arg6: memref<1x128x256xf32, #tpu.memory_space<vmem>>, %arg7: memref<128x576xbf16, #tpu.memory_space<vmem>>) attributes {dimension_semantics = [#tpu.dimension_semantics<parallel>, #tpu.dimension_semantics<arbitrary>], iteration_bounds = array<i64: 2, 2>, scalar_prefetch = 0 : i64, scratch_operands = 1 : i64, tpu.core_type = #tpu.core_type<tc>, window_params = [{transform_indices = @transform_0, window_bounds = array<i64: 1, 18, 18, 64>}, {pipeline_mode = #tpu.pipeline_mode<synchronous>, transform_indices = @transform_1, window_bounds = array<i64: 576, 256>}, {pipeline_mode = #tpu.pipeline_mode<synchronous>, transform_indices = @transform_2, window_bounds = array<i64: 1, 256>}, {transform_indices = @transform_3, window_bounds = array<i64: 1>}, {transform_indices = @transform_4, window_bounds = array<i64: 1, 128, 256>}]} {
    %c8_i32 = arith.constant 8 : i32
    %0 = arith.muli %arg1, %c8_i32 : i32
    %1 = tpu.assume_multiple %0, 8 : i32
    %c0_i32 = arith.constant 0 : i32
    %2 = arith.addi %1, %c0_i32 : i32
    %c0 = arith.constant 0 : index
    %3 = arith.index_cast %2 : i32 to index
    %c0_0 = arith.constant 0 : index
    %c0_1 = arith.constant 0 : index
    %4 = vector.load %arg2[%c0, %3, %c0_0, %c0_1] : memref<1x18x18x64xbf16, #tpu.memory_space<vmem>>, vector<1x8x16x64xbf16>
    %5 = vector.shape_cast %4 : vector<1x8x16x64xbf16> to vector<8x16x64xbf16>
    %6 = vector.shape_cast %5 : vector<8x16x64xbf16> to vector<128x64xbf16>
    %c0_2 = arith.constant 0 : index
    %c0_3 = arith.constant 0 : index
    %7 = vector.load %arg7[%c0_2, %c0_3] : memref<128x576xbf16, #tpu.memory_space<vmem>>, vector<128x64xbf16>
    tpu.vector_store %arg7[%c0_2, %c0_3], %6 {strides = array<i32>} : memref<128x576xbf16, #tpu.memory_space<vmem>>, vector<128x64xbf16>,
    %c0_i32_4 = arith.constant 0 : i32
    %8 = arith.addi %1, %c0_i32_4 : i32
    %c0_5 = arith.constant 0 : index
    %9 = arith.index_cast %8 : i32 to index
    %c1 = arith.constant 1 : index
    %c0_6 = arith.constant 0 : index
    %10 = vector.load %arg2[%c0_5, %9, %c1, %c0_6] : memref<1x18x18x64xbf16, #tpu.memory_space<vmem>>, vector<1x8x16x64xbf16>
    %11 = vector.shape_cast %10 : vector<1x8x16x64xbf16> to vector<8x16x64xbf16>
    %12 = vector.shape_cast %11 : vector<8x16x64xbf16> to vector<128x64xbf16>
    %c0_7 = arith.constant 0 : index
    %c64 = arith.constant 64 : index
    %13 = vector.load %arg7[%c0_7, %c64] : memref<128x576xbf16, #tpu.memory_space<vmem>>, vector<128x64xbf16>
    tpu.vector_store %arg7[%c0_7, %c64], %12 {strides = array<i32>} : memref<128x576xbf16, #tpu.memory_space<vmem>>, vector<128x64xbf16>,
    %c0_i32_8 = arith.constant 0 : i32
    %14 = arith.addi %1, %c0_i32_8 : i32
    %c0_9 = arith.constant 0 : index
    %15 = arith.index_cast %14 : i32 to index
    %c2 = arith.constant 2 : index
    %c0_10 = arith.constant 0 : index
    %16 = vector.load %arg2[%c0_9, %15, %c2, %c0_10] : memref<1x18x18x64xbf16, #tpu.memory_space<vmem>>, vector<1x8x16x64xbf16>
    %17 = vector.shape_cast %16 : vector<1x8x16x64xbf16> to vector<8x16x64xbf16>
    %18 = vector.shape_cast %17 : vector<8x16x64xbf16> to vector<128x64xbf16>
    %c0_11 = arith.constant 0 : index
    %c128 = arith.constant 128 : index
    %19 = vector.load %arg7[%c0_11, %c128] : memref<128x576xbf16, #tpu.memory_space<vmem>>, vector<128x64xbf16>
    tpu.vector_store %arg7[%c0_11, %c128], %18 {strides = array<i32>} : memref<128x576xbf16, #tpu.memory_space<vmem>>, vector<128x64xbf16>,
    %c1_i32 = arith.constant 1 : i32
    %20 = arith.addi %1, %c1_i32 : i32
    %c0_12 = arith.constant 0 : index
    %21 = arith.index_cast %20 : i32 to index
    %c0_13 = arith.constant 0 : index
    %c0_14 = arith.constant 0 : index
    %22 = vector.load %arg2[%c0_12, %21, %c0_13, %c0_14] : memref<1x18x18x64xbf16, #tpu.memory_space<vmem>>, vector<1x8x16x64xbf16>
    %23 = vector.shape_cast %22 : vector<1x8x16x64xbf16> to vector<8x16x64xbf16>
    %24 = vector.shape_cast %23 : vector<8x16x64xbf16> to vector<128x64xbf16>
    %c0_15 = arith.constant 0 : index
    %c192 = arith.constant 192 : index
    %25 = vector.load %arg7[%c0_15, %c192] : memref<128x576xbf16, #tpu.memory_space<vmem>>, vector<128x64xbf16>
    tpu.vector_store %arg7[%c0_15, %c192], %24 {strides = array<i32>} : memref<128x576xbf16, #tpu.memory_space<vmem>>, vector<128x64xbf16>,
    %c1_i32_16 = arith.constant 1 : i32
    %26 = arith.addi %1, %c1_i32_16 : i32
    %c0_17 = arith.constant 0 : index
    %27 = arith.index_cast %26 : i32 to index
    %c1_18 = arith.constant 1 : index
    %c0_19 = arith.constant 0 : index
    %28 = vector.load %arg2[%c0_17, %27, %c1_18, %c0_19] : memref<1x18x18x64xbf16, #tpu.memory_space<vmem>>, vector<1x8x16x64xbf16>
    %29 = vector.shape_cast %28 : vector<1x8x16x64xbf16> to vector<8x16x64xbf16>
    %30 = vector.shape_cast %29 : vector<8x16x64xbf16> to vector<128x64xbf16>
    %c0_20 = arith.constant 0 : index
    %c256 = arith.constant 256 : index
    %31 = vector.load %arg7[%c0_20, %c256] : memref<128x576xbf16, #tpu.memory_space<vmem>>, vector<128x64xbf16>
    tpu.vector_store %arg7[%c0_20, %c256], %30 {strides = array<i32>} : memref<128x576xbf16, #tpu.memory_space<vmem>>, vector<128x64xbf16>,
    %c1_i32_21 = arith.constant 1 : i32
    %32 = arith.addi %1, %c1_i32_21 : i32
    %c0_22 = arith.constant 0 : index
    %33 = arith.index_cast %32 : i32 to index
    %c2_23 = arith.constant 2 : index
    %c0_24 = arith.constant 0 : index
    %34 = vector.load %arg2[%c0_22, %33, %c2_23, %c0_24] : memref<1x18x18x64xbf16, #tpu.memory_space<vmem>>, vector<1x8x16x64xbf16>
    %35 = vector.shape_cast %34 : vector<1x8x16x64xbf16> to vector<8x16x64xbf16>
    %36 = vector.shape_cast %35 : vector<8x16x64xbf16> to vector<128x64xbf16>
    %c0_25 = arith.constant 0 : index
    %c320 = arith.constant 320 : index
    %37 = vector.load %arg7[%c0_25, %c320] : memref<128x576xbf16, #tpu.memory_space<vmem>>, vector<128x64xbf16>
    tpu.vector_store %arg7[%c0_25, %c320], %36 {strides = array<i32>} : memref<128x576xbf16, #tpu.memory_space<vmem>>, vector<128x64xbf16>,
    %c2_i32 = arith.constant 2 : i32
    %38 = arith.addi %1, %c2_i32 : i32
    %c0_26 = arith.constant 0 : index
    %39 = arith.index_cast %38 : i32 to index
    %c0_27 = arith.constant 0 : index
    %c0_28 = arith.constant 0 : index
    %40 = vector.load %arg2[%c0_26, %39, %c0_27, %c0_28] : memref<1x18x18x64xbf16, #tpu.memory_space<vmem>>, vector<1x8x16x64xbf16>
    %41 = vector.shape_cast %40 : vector<1x8x16x64xbf16> to vector<8x16x64xbf16>
    %42 = vector.shape_cast %41 : vector<8x16x64xbf16> to vector<128x64xbf16>
    %c0_29 = arith.constant 0 : index
    %c384 = arith.constant 384 : index
    %43 = vector.load %arg7[%c0_29, %c384] : memref<128x576xbf16, #tpu.memory_space<vmem>>, vector<128x64xbf16>
    tpu.vector_store %arg7[%c0_29, %c384], %42 {strides = array<i32>} : memref<128x576xbf16, #tpu.memory_space<vmem>>, vector<128x64xbf16>,
    %c2_i32_30 = arith.constant 2 : i32
    %44 = arith.addi %1, %c2_i32_30 : i32
    %c0_31 = arith.constant 0 : index
    %45 = arith.index_cast %44 : i32 to index
    %c1_32 = arith.constant 1 : index
    %c0_33 = arith.constant 0 : index
    %46 = vector.load %arg2[%c0_31, %45, %c1_32, %c0_33] : memref<1x18x18x64xbf16, #tpu.memory_space<vmem>>, vector<1x8x16x64xbf16>
    %47 = vector.shape_cast %46 : vector<1x8x16x64xbf16> to vector<8x16x64xbf16>
    %48 = vector.shape_cast %47 : vector<8x16x64xbf16> to vector<128x64xbf16>
    %c0_34 = arith.constant 0 : index
    %c448 = arith.constant 448 : index
    %49 = vector.load %arg7[%c0_34, %c448] : memref<128x576xbf16, #tpu.memory_space<vmem>>, vector<128x64xbf16>
    tpu.vector_store %arg7[%c0_34, %c448], %48 {strides = array<i32>} : memref<128x576xbf16, #tpu.memory_space<vmem>>, vector<128x64xbf16>,
    %c2_i32_35 = arith.constant 2 : i32
    %50 = arith.addi %1, %c2_i32_35 : i32
    %c0_36 = arith.constant 0 : index
    %51 = arith.index_cast %50 : i32 to index
    %c2_37 = arith.constant 2 : index
    %c0_38 = arith.constant 0 : index
    %52 = vector.load %arg2[%c0_36, %51, %c2_37, %c0_38] : memref<1x18x18x64xbf16, #tpu.memory_space<vmem>>, vector<1x8x16x64xbf16>
    %53 = vector.shape_cast %52 : vector<1x8x16x64xbf16> to vector<8x16x64xbf16>
    %54 = vector.shape_cast %53 : vector<8x16x64xbf16> to vector<128x64xbf16>
    %c0_39 = arith.constant 0 : index
    %c512 = arith.constant 512 : index
    %55 = vector.load %arg7[%c0_39, %c512] : memref<128x576xbf16, #tpu.memory_space<vmem>>, vector<128x64xbf16>
    tpu.vector_store %arg7[%c0_39, %c512], %54 {strides = array<i32>} : memref<128x576xbf16, #tpu.memory_space<vmem>>, vector<128x64xbf16>,
    %c0_40 = arith.constant 0 : index
    %c0_41 = arith.constant 0 : index
    %56 = vector.load %arg7[%c0_40, %c0_41] : memref<128x576xbf16, #tpu.memory_space<vmem>>, vector<128x576xbf16>
    %c0_42 = arith.constant 0 : index
    %c0_43 = arith.constant 0 : index
    %57 = vector.load %arg3[%c0_42, %c0_43] : memref<576x256xbf16, #tpu.memory_space<vmem>>, vector<576x256xbf16>
    %cst = arith.constant dense<0.000000e+00> : vector<128x256xf32>
    %58 = tpu.matmul %56, %57, %cst {dimension_numbers = #tpu.dot_dimension_numbers<[1], [0], [0], [1], [0, 0, 1, 1], [], []>} : vector<128x576xbf16>, vector<576x256xbf16>, vector<128x256xf32> -> vector<128x256xf32>
    %c0_44 = arith.constant 0 : index
    %c0_45 = arith.constant 0 : index
    %59 = vector.load %arg4[%c0_44, %c0_45] : memref<1x256xf32, #tpu.memory_space<vmem>>, vector<1x256xf32>
    %60 = vector.broadcast %59 : vector<1x256xf32> to vector<128x256xf32>
    %61 = arith.addf %58, %60 : vector<128x256xf32>
    %c0_46 = arith.constant 0 : index
    %62 = memref.load %arg5[%c0_46] : memref<1xf32, #tpu.memory_space<smem>>
    %cst_47 = arith.constant 0.000000e+00 : f32
    %63 = vector.broadcast %cst_47 : f32 to vector<128x256xf32>
    %64 = arith.cmpf oge, %61, %63 : vector<128x256xf32>
    %65 = vector.broadcast %62 : f32 to vector<128x256xf32>
    %66 = arith.mulf %65, %61 : vector<128x256xf32>
    %67 = arith.select %64, %61, %66 : vector<128x256xi1>, vector<128x256xf32>
    %c0_48 = arith.constant 0 : index
    %c0_49 = arith.constant 0 : index
    %c0_50 = arith.constant 0 : index
    %68 = vector.load %arg6[%c0_48, %c0_49, %c0_50] : memref<1x128x256xf32, #tpu.memory_space<vmem>>, vector<1x128x256xf32>
    %69 = vector.shape_cast %68 : vector<1x128x256xf32> to vector<128x256xf32>
    %70 = vector.shape_cast %67 : vector<128x256xf32> to vector<1x128x256xf32>
    tpu.vector_store %arg6[%c0_48, %c0_49, %c0_50], %70 {strides = array<i32>} : memref<1x128x256xf32, #tpu.memory_space<vmem>>, vector<1x128x256xf32>,
    return
  }
  func.func @transform_0(%arg0: i32, %arg1: i32) -> (i32, i32, i32, i32) {
    %c0_i32 = arith.constant 0 : i32
    %c0_i32_0 = arith.constant 0 : i32
    %c0_i32_1 = arith.constant 0 : i32
    %c0_i32_2 = arith.constant 0 : i32
    return %arg0, %c0_i32, %c0_i32_0, %c0_i32_1 : i32, i32, i32, i32
  }
  func.func @transform_1(%arg0: i32, %arg1: i32) -> (i32, i32) {
    %c0_i32 = arith.constant 0 : i32
    %c0_i32_0 = arith.constant 0 : i32
    %c0_i32_1 = arith.constant 0 : i32
    return %c0_i32, %c0_i32_0 : i32, i32
  }
  func.func @transform_2(%arg0: i32, %arg1: i32) -> (i32, i32) {
    %c0_i32 = arith.constant 0 : i32
    %c0_i32_0 = arith.constant 0 : i32
    %c0_i32_1 = arith.constant 0 : i32
    return %c0_i32, %c0_i32_0 : i32, i32
  }
  func.func @transform_3(%arg0: i32, %arg1: i32) -> i32 {
    %c0_i32 = arith.constant 0 : i32
    %c0_i32_0 = arith.constant 0 : i32
    return %c0_i32 : i32
  }
  func.func @transform_4(%arg0: i32, %arg1: i32) -> (i32, i32, i32) {
    %c0_i32 = arith.constant 0 : i32
    %c0_i32_0 = arith.constant 0 : i32
    return %arg0, %arg1, %c0_i32 : i32, i32, i32
  }
}

</mosaic_0001>

<llo_original>
// kernel: upsampling_block_forward.1
$region0: #{upsampling_block_forward.1}
  #allocation0 [shape = 'u32[]', space=smem, size = 0x4, offset = 0x4, fixed_abs, tag = 'smem constant byte address 0x4 - core index']
  #allocation1 [shape = 'u32[144,128]{1,0:T(1,128)}', space=vmem, size = 0x12000, scoped, tag = 'internal scratch']
  #allocation2 [shape = 'bf16[128,576]{1,0:T(8,128)(2,1)}', space=vmem, size = 0x28000, scoped, tag = 'scratch operand']
  #allocation3 [shape = 'f32[1]{0:T(128)S(6)}', space=smem, size = 0x200, scoped, tag = 'scoped memory for upsampling_block_forward.1']
  %s0 = inlined_call_operand.vmem [shape: bf16[2,18,18,64], index: 0, kind: input, shape index: {}]
  %s1 = inlined_call_operand.vmem [shape: bf16[576,256], index: 1, kind: input, shape index: {}]
  %s2 = inlined_call_operand.hbm [shape: f32[1,256], index: 2, kind: input, shape index: {}]
  %s3 = inlined_call_operand.<no memory space> [shape: f32[1], index: 3, kind: input, shape index: {}]
  %s4 = inlined_call_operand.vmem [shape: f32[2,256,256], index: 4, kind: output, shape index: {}]
  %s5 = sld [smem:[#allocation0]]
  $region53: #{upsampling_block_forward.1} parent=0
    _
  %s7 = ssub.s32 1, %s5
  %s8 = scalar_select 0, %s7, %s5
  %9 = sst [smem:[#allocation3]] %s3
  $region1: #{upsampling_block_forward.1} parent=0
    #allocation4 [shape = 'u8[1024]{0}', space=vmem, size = 0x400, scoped, tag = 'input window, operand 2, single buffered']
    #allocation5 [shape = 's32[2]{0}', space=sflag, size = 0x8, scoped, tag = 'scoped memory for upsampling_block_forward.1']
    %10 = vsyncpa [#allocation5], 0
    loop: start=0, step=1, limit=6
    $region2: #{upsampling_block_forward.1} parent=1 // loop_pre_header
      _
    $region3: #{upsampling_block_forward.1} parent=1 // loop_header
      %s12 = sphi 0, %s16
      %p13 = scmp.ge.s32.totalorder %s12, 6
      %s19 = sphi 0, %s31
      %s20 = sphi 0, %s27
      %s21 = sphi 0, %s19
      %s22 = sphi 0, %s20
      %s23 = sphi 0, %s21
      %s24 = sphi 0, %s22
      %s34 = sphi 0, %s36
      %s37 = sphi 0, %s34
      %s38 = sphi 0, %s37
      %s54 = sphi 0, %s38
      %s58 = sphi 0, %s58
      %s60 = sphi 0, %s58
      %s61 = sphi 0, %s60
      %s75 = sphi 0, %s61
      %s79 = sphi 0, %s79
      %s81 = sphi 0, %s79
      %s82 = sphi 0, %s81
      %s96 = sphi 0, %s82
      %s100 = sphi 0, %s100
      %s102 = sphi 0, %s100
      %s103 = sphi 0, %s102
      %s117 = sphi 0, %s103
      %s125 = sphi 0, %s127
      %s128 = sphi 0, %s125
      %s129 = sphi 0, %s128
      %s145 = sphi 0, %s129
    $region4: #{upsampling_block_forward.1} parent=1 // loop_header_branch
      %15 = sbr.rel (%p13) target = $region8
    $region5: #{upsampling_block_forward.1} parent=1 // loop_body
      %s17 = ssub.s32 %s12, 1
      %s18 = ssub.s32 %s12, 2
      %s25 = sadd.s32 1, %s20
      %p26 = scmp.ge.s32.totalorder %s25, 2
      %s27 = scalar_select %p26, 0, %s25
      %s28 = sadd.s32 1, %s19
      %s29 = scalar_select %p26, %s28, %s19
      %p30 = scmp.ge.s32.totalorder %s29, 2
      %s31 = scalar_select %p30, 0, %s29
      %s32 = ssub.s32 %s19, %s31
      %p33 = scmp.eq.s32.totalorder %s32, 0
      %s35 = sadd.s32 %s34, 1
      %s36 = scalar_select %p33, %s34, %s35
      %p39 = pneg %p33
      %p40 = scmp.eq.s32.totalorder %s12, 3
      %p41 = por %p39, %p40
      %p42 = scmp.ne.s32.totalorder %s34, %s37
      %p43 = scmp.eq.s32.totalorder %s12, 0
      %p44 = por %p42, %p43
      %p45 = scmp.ne.s32.totalorder %s34, %s37
      %p46 = scmp.eq.s32.totalorder %s17, 3
      %p47 = por %p45, %p46
      %p48 = scmp.ne.s32.totalorder %s37, %s38
      %p49 = scmp.eq.s32.totalorder %s17, 0
      %p50 = por %p48, %p49
      %p51 = scmp.ne.s32.totalorder %s37, %s38
      %p52 = scmp.eq.s32.totalorder %s18, 3
      %p53 = por %p51, %p52
      %p55 = scmp.ne.s32.totalorder %s38, %s54
      %p56 = scmp.eq.s32.totalorder %s18, 0
      %p57 = por %p55, %p56
      %s59 = sadd.s32 %s58, 1
      %p62 = scmp.eq.s32.totalorder %s12, 3
      %p63 = scmp.ne.s32.totalorder %s58, %s60
      %p64 = scmp.eq.s32.totalorder %s12, 0
      %p65 = por %p63, %p64
      %p66 = scmp.ne.s32.totalorder %s58, %s60
      %p67 = scmp.eq.s32.totalorder %s17, 3
      %p68 = por %p66, %p67
      %p69 = scmp.ne.s32.totalorder %s60, %s61
      %p70 = scmp.eq.s32.totalorder %s17, 0
      %p71 = por %p69, %p70
      %p72 = scmp.ne.s32.totalorder %s60, %s61
      %p73 = scmp.eq.s32.totalorder %s18, 3
      %p74 = por %p72, %p73
      %p76 = scmp.ne.s32.totalorder %s61, %s75
      %p77 = scmp.eq.s32.totalorder %s18, 0
      %p78 = por %p76, %p77
      %s80 = sadd.s32 %s79, 1
      %p83 = scmp.eq.s32.totalorder %s12, 3
      %p84 = scmp.ne.s32.totalorder %s79, %s81
      %p85 = scmp.eq.s32.totalorder %s12, 0
      %p86 = por %p84, %p85
      %p87 = scmp.ne.s32.totalorder %s79, %s81
      %p88 = scmp.eq.s32.totalorder %s17, 3
      %p89 = por %p87, %p88
      %p90 = scmp.ne.s32.totalorder %s81, %s82
      %p91 = scmp.eq.s32.totalorder %s17, 0
      %p92 = por %p90, %p91
      %p93 = scmp.ne.s32.totalorder %s81, %s82
      %p94 = scmp.eq.s32.totalorder %s18, 3
      %p95 = por %p93, %p94
      %p97 = scmp.ne.s32.totalorder %s82, %s96
      %p98 = scmp.eq.s32.totalorder %s18, 0
      %p99 = por %p97, %p98
      %s101 = sadd.s32 %s100, 1
      %p104 = scmp.eq.s32.totalorder %s12, 3
      %p105 = scmp.ne.s32.totalorder %s100, %s102
      %p106 = scmp.eq.s32.totalorder %s12, 0
      %p107 = por %p105, %p106
      %p108 = scmp.ne.s32.totalorder %s100, %s102
      %p109 = scmp.eq.s32.totalorder %s17, 3
      %p110 = por %p108, %p109
      %p111 = scmp.ne.s32.totalorder %s102, %s103
      %p112 = scmp.eq.s32.totalorder %s17, 0
      %p113 = por %p111, %p112
      %p114 = scmp.ne.s32.totalorder %s102, %s103
      %p115 = scmp.eq.s32.totalorder %s18, 3
      %p116 = por %p114, %p115
      %p118 = scmp.ne.s32.totalorder %s103, %s117
      %p119 = scmp.eq.s32.totalorder %s18, 0
      %p120 = por %p118, %p119
      %s121 = ssub.s32 %s19, %s31
      %s122 = ssub.s32 %s20, %s27
      %s123 = sor.u32 %s121, %s122
      %p124 = scmp.eq.s32.totalorder %s123, 0
      %s126 = sadd.s32 %s125, 1
      %s127 = scalar_select %p124, %s125, %s126
      %p130 = pneg %p124
      %p131 = scmp.eq.s32.totalorder %s12, 3
      %p132 = por %p130, %p131
      %p133 = scmp.ne.s32.totalorder %s125, %s128
      %p134 = scmp.eq.s32.totalorder %s12, 0
      %p135 = por %p133, %p134
      %p136 = scmp.ne.s32.totalorder %s125, %s128
      %p137 = scmp.eq.s32.totalorder %s17, 3
      %p138 = por %p136, %p137
      %p139 = scmp.ne.s32.totalorder %s128, %s129
      %p140 = scmp.eq.s32.totalorder %s17, 0
      %p141 = por %p139, %p140
      %p142 = scmp.ne.s32.totalorder %s128, %s129
      %p143 = scmp.eq.s32.totalorder %s18, 3
      %p144 = por %p142, %p143
      %p146 = scmp.ne.s32.totalorder %s129, %s145
      %p147 = scmp.eq.s32.totalorder %s18, 0
      %p148 = por %p146, %p147
      %p149 = scmp.le.s32.totalorder 1, %s12
      %p150 = scmp.lt.s32.totalorder %s12, 5
      %p151 = pnand %p149, %p150
      %p152 = pneg %p151
      // Predicated region
      $region9: #{upsampling_block_forward.1} parent=5 // pred_check
        _
      $region10: #{upsampling_block_forward.1} parent=5 // pred_check_branch
        %154 = sbr.rel (%p151) target = $region12
      $region11: #{upsampling_block_forward.1} parent=5 // pred_region
        %s155 = ssub.s32 %s12, 1
        // Predicated region
        $region13: #{upsampling_block_forward.1} parent=11 // pred_check
          %p156 = pneg %p71
        $region14: #{upsampling_block_forward.1} parent=11 // pred_check_branch
          %158 = sbr.rel (%p156) target = $region16
        $region15: #{upsampling_block_forward.1} parent=11 // pred_region
          _
        $region16: #{upsampling_block_forward.1} parent=11 // pred_fallthru
          _
        // Predicated region
        $region17: #{upsampling_block_forward.1} parent=11 // pred_check
          %p159 = pneg %p92
        $region18: #{upsampling_block_forward.1} parent=11 // pred_check_branch
          %161 = sbr.rel (%p159) target = $region20
        $region19: #{upsampling_block_forward.1} parent=11 // pred_region
          %s163 = ssub.s32 32, 32
          %164 = vsyncadd [#allocation5], %s163
          %s166 = sshll.u32 [#allocation4], 4
          %s167 = int_to_ptr.vmem [resolvable:$true] %s166
          %169 = dma.hbm_to_vmem [thread:$0]  %s2, 32, %s167, [#allocation5]
        $region20: #{upsampling_block_forward.1} parent=11 // pred_fallthru
          _
        // Predicated region
        $region21: #{upsampling_block_forward.1} parent=11 // pred_check
          %p170 = pneg %p113
        $region22: #{upsampling_block_forward.1} parent=11 // pred_check_branch
          %172 = sbr.rel (%p170) target = $region24
        $region23: #{upsampling_block_forward.1} parent=11 // pred_region
          _
        $region24: #{upsampling_block_forward.1} parent=11 // pred_fallthru
          _
      $region12: #{upsampling_block_forward.1} parent=5 // pred_fallthru
        _
      %p173 = scmp.lt.s32.totalorder %s12, 4
      // Predicated region
      $region25: #{upsampling_block_forward.1} parent=5 // pred_check
        %p174 = pneg %p173
      $region26: #{upsampling_block_forward.1} parent=5 // pred_check_branch
        %176 = sbr.rel (%p174) target = $region28
      $region27: #{upsampling_block_forward.1} parent=5 // pred_region
        // Predicated region
        $region29: #{upsampling_block_forward.1} parent=27 // pred_check
          %p177 = pneg %p44
        $region30: #{upsampling_block_forward.1} parent=27 // pred_check_branch
          %179 = sbr.rel (%p177) target = $region32
        $region31: #{upsampling_block_forward.1} parent=27 // pred_region
          %p180 = scmp.lt.s32.totalorder %s19, 1
          %s181 = scalar_select %p180, %s19, 1
          %s182 = smul.addr %s181, 54
          %s183 = smul.addr %s182, 4
          %s184 = scalar_lea.vmem %s0, %s183
        $region32: #{upsampling_block_forward.1} parent=27 // pred_fallthru
          _
      $region28: #{upsampling_block_forward.1} parent=5 // pred_fallthru
        _
      %p185 = scmp.le.s32.totalorder 1, %s12
      %p186 = scmp.lt.s32.totalorder %s12, 5
      %p187 = pnand %p185, %p186
      %p188 = pneg %p187
      // Predicated region
      $region33: #{upsampling_block_forward.1} parent=5 // pred_check
        _
      $region34: #{upsampling_block_forward.1} parent=5 // pred_check_branch
        %190 = sbr.rel (%p187) target = $region36
      $region35: #{upsampling_block_forward.1} parent=5 // pred_region
        %s191 = ssub.s32 %s12, 1
        // Predicated region
        $region37: #{upsampling_block_forward.1} parent=35 // pred_check
          %p192 = pneg %p92
        $region38: #{upsampling_block_forward.1} parent=35 // pred_check_branch
          %194 = sbr.rel (%p192) target = $region40
        $region39: #{upsampling_block_forward.1} parent=35 // pred_region
          %195 = dma.done [#allocation5], 32
        $region40: #{upsampling_block_forward.1} parent=35 // pred_fallthru
          _
        %p196 = scmp.lt.s32.totalorder %s21, 1
        %s197 = scalar_select %p196, %s21, 1
        %s198 = smul.addr %s197, 54
        %s199 = smul.addr %s198, 4
        %s200 = scalar_lea.vmem %s0, %s199
        %p201 = pneg %p50
        %p202 = pneg %p47
        %p203 = pneg %p71
        %p204 = pneg %p68
        %p205 = pneg %p92
        %p206 = pneg %p89
        %p207 = pneg %p113
        %p208 = pneg %p110
        %p209 = pneg %p141
        %p210 = pneg %p138
        %s211 = smul.u32 16, %s22
        %p212 = scmp.lt.s32.totalorder %s21, 1
        %s213 = scalar_select %p212, %s21, 1
        %p214 = scmp.lt.s32.totalorder %s211, 31
        %s215 = scalar_select %p214, %s211, 31
        %s216 = smul.addr %s215, 2
        %s217 = smul.addr %s213, 64
        %s218 = sadd.s32 %s216, %s217
        %s219 = smul.addr %s218, 8
        %s220 = scalar_lea.vmem %s4, %s219
        %p221 = scmp.lt.s32.totalorder %s21, 1
        %s222 = scalar_select %p221, %s21, 1
        %s223 = smul.addr %s222, 54
        %s224 = smul.addr %s223, 4
        %s225 = scalar_lea.vmem %s0, %s224
        %s226 = smul.u32 16, %s22
        %p227 = scmp.lt.s32.totalorder %s21, 1
        %s228 = scalar_select %p227, %s21, 1
        %p229 = scmp.lt.s32.totalorder %s226, 31
        %s230 = scalar_select %p229, %s226, 31
        %s231 = smul.addr %s230, 2
        %s232 = smul.addr %s228, 64
        %s233 = sadd.s32 %s231, %s232
        %s234 = smul.addr %s233, 8
        %s235 = scalar_lea.vmem %s4, %s234
        %s236 = smul.u32 16, %s22
        %s238 = smul.u32 %s22, 8
        %s239 = smul.u32 %s238, 3
        %s240 = smul.addr %s239, 4
        %s241 = scalar_lea.vmem %s225, %s240
        %v242 = vld [vmem:[%s241] sm:$0xf]
        %v243 = vld [vmem:[%s241 + $0x4] sm:$0xf]
        %v244 = vld [vmem:[%s241 + $0xc] sm:$0xf]
        %v245 = vld [vmem:[%s241 + $0x10] sm:$0xf]
        %v246 = vld [vmem:[%s241 + $0x18] sm:$0xf]
        %v247 = vld [vmem:[%s241 + $0x1c] sm:$0xf]
        %v248 = vld [vmem:[%s241 + $0x24] sm:$0xf]
        %v249 = vld [vmem:[%s241 + $0x28] sm:$0xf]
        %v250 = vld [vmem:[%s241 + $0x30] sm:$0xf]
        %v251 = vld [vmem:[%s241 + $0x34] sm:$0xf]
        %v252 = vld [vmem:[%s241 + $0x3c] sm:$0xf]
        %v253 = vld [vmem:[%s241 + $0x40] sm:$0xf]
        %v254 = vld [vmem:[%s241 + $0x48] sm:$0xf]
        %v255 = vld [vmem:[%s241 + $0x4c] sm:$0xf]
        %v256 = vld [vmem:[%s241 + $0x54] sm:$0xf]
        %v257 = vld [vmem:[%s241 + $0x58] sm:$0xf]
        %vm258 = vcmask 519168
        %259 = vst.msk [vmem:[#allocation2] sm:$0xf] %vm258, %v242
        %260 = vst.msk [vmem:[#allocation2 + $0x14] sm:$0xf] %vm258, %v243
        %261 = vst.msk [vmem:[#allocation2 + $0x28] sm:$0xf] %vm258, %v244
        %262 = vst.msk [vmem:[#allocation2 + $0x3c] sm:$0xf] %vm258, %v245
        %263 = vst.msk [vmem:[#allocation2 + $0x50] sm:$0xf] %vm258, %v246
        %264 = vst.msk [vmem:[#allocation2 + $0x64] sm:$0xf] %vm258, %v247
        %265 = vst.msk [vmem:[#allocation2 + $0x78] sm:$0xf] %vm258, %v248
        %266 = vst.msk [vmem:[#allocation2 + $0x8c] sm:$0xf] %vm258, %v249
        %267 = vst.msk [vmem:[#allocation2 + $0xa0] sm:$0xf] %vm258, %v250
        %268 = vst.msk [vmem:[#allocation2 + $0xb4] sm:$0xf] %vm258, %v251
        %269 = vst.msk [vmem:[#allocation2 + $0xc8] sm:$0xf] %vm258, %v252
        %270 = vst.msk [vmem:[#allocation2 + $0xdc] sm:$0xf] %vm258, %v253
        %271 = vst.msk [vmem:[#allocation2 + $0xf0] sm:$0xf] %vm258, %v254
        %272 = vst.msk [vmem:[#allocation2 + $0x104] sm:$0xf] %vm258, %v255
        %273 = vst.msk [vmem:[#allocation2 + $0x118] sm:$0xf] %vm258, %v256
        %274 = vst.msk [vmem:[#allocation2 + $0x12c] sm:$0xf] %vm258, %v257
        %v275 = vld [vmem:[%s241] sm:$0xf]
        %v276 = vld [vmem:[%s241 + $0x4] sm:$0xf]
        %v277 = vld [vmem:[%s241 + $0x8] sm:$0x1]
        %v278 = vld [vmem:[%s241 + $0xc] sm:$0xf]
        %v279 = vld [vmem:[%s241 + $0x10] sm:$0xf]
        %v280 = vld [vmem:[%s241 + $0x14] sm:$0x1]
        %v281 = vld [vmem:[%s241 + $0x18] sm:$0xf]
        %v282 = vld [vmem:[%s241 + $0x1c] sm:$0xf]
        %v283 = vld [vmem:[%s241 + $0x20] sm:$0x1]
        %v284 = vld [vmem:[%s241 + $0x24] sm:$0xf]
        %v285 = vld [vmem:[%s241 + $0x28] sm:$0xf]
        %v286 = vld [vmem:[%s241 + $0x2c] sm:$0x1]
        %v287 = vld [vmem:[%s241 + $0x30] sm:$0xf]
        %v288 = vld [vmem:[%s241 + $0x34] sm:$0xf]
        %v289 = vld [vmem:[%s241 + $0x38] sm:$0x1]
        %v290 = vld [vmem:[%s241 + $0x3c] sm:$0xf]
        %v291 = vld [vmem:[%s241 + $0x40] sm:$0xf]
        %v292 = vld [vmem:[%s241 + $0x44] sm:$0x1]
        %v293 = vld [vmem:[%s241 + $0x48] sm:$0xf]
        %v294 = vld [vmem:[%s241 + $0x4c] sm:$0xf]
        %v295 = vld [vmem:[%s241 + $0x50] sm:$0x1]
        %v296 = vld [vmem:[%s241 + $0x54] sm:$0xf]
        %v297 = vld [vmem:[%s241 + $0x58] sm:$0xf]
        %v298 = vld [vmem:[%s241 + $0x5c] sm:$0x1]
        %vm299 = vsmask.f32 3328
        %vm300 = vsmask.f32 7440
        %vm301 = vmor %vm299, %vm300
        %v303 = vshrl.u32 %v275, 16
        %v305 = vrot.slane %v303, 4
        %v306 = vshll.u32 %v275, 16
        %v308 = vrot.slane %v306, 5
        %v309 = vor.u32 %v305, %v308
        %v310 = vrot.slane %v309, 4
        %v312 = vshll.u32 %v276, 16
        %v314 = vrot.slane %v312, 5
        %v315 = vsel %vm301, %v310, %v314
        %v316 = vshrl.u32 %v276, 16
        %v318 = vrot.slane %v316, 4
        %v319 = vor.u32 %v318, %v314
        %v320 = vrot.slane %v319, 4
        %v322 = vshll.u32 %v277, 16
        %v324 = vrot.slane %v322, 5
        %v325 = vsel %vm301, %v320, %v324
        %v327 = vshrl.u32 %v278, 16
        %v329 = vrot.slane %v327, 4
        %v330 = vshll.u32 %v278, 16
        %v332 = vrot.slane %v330, 5
        %v333 = vor.u32 %v329, %v332
        %v334 = vrot.slane %v333, 4
        %v336 = vshll.u32 %v279, 16
        %v338 = vrot.slane %v336, 5
        %v339 = vsel %vm301, %v334, %v338
        %v340 = vshrl.u32 %v279, 16
        %v342 = vrot.slane %v340, 4
        %v343 = vor.u32 %v342, %v338
        %v344 = vrot.slane %v343, 4
        %v346 = vshll.u32 %v280, 16
        %v348 = vrot.slane %v346, 5
        %v349 = vsel %vm301, %v344, %v348
        %v351 = vshrl.u32 %v281, 16
        %v353 = vrot.slane %v351, 4
        %v354 = vshll.u32 %v281, 16
        %v356 = vrot.slane %v354, 5
        %v357 = vor.u32 %v353, %v356
        %v358 = vrot.slane %v357, 4
        %v360 = vshll.u32 %v282, 16
        %v362 = vrot.slane %v360, 5
        %v363 = vsel %vm301, %v358, %v362
        %v364 = vshrl.u32 %v282, 16
        %v366 = vrot.slane %v364, 4
        %v367 = vor.u32 %v366, %v362
        %v368 = vrot.slane %v367, 4
        %v370 = vshll.u32 %v283, 16
        %v372 = vrot.slane %v370, 5
        %v373 = vsel %vm301, %v368, %v372
        %v375 = vshrl.u32 %v284, 16
        %v377 = vrot.slane %v375, 4
        %v378 = vshll.u32 %v284, 16
        %v380 = vrot.slane %v378, 5
        %v381 = vor.u32 %v377, %v380
        %v382 = vrot.slane %v381, 4
        %v384 = vshll.u32 %v285, 16
        %v386 = vrot.slane %v384, 5
        %v387 = vsel %vm301, %v382, %v386
        %v388 = vshrl.u32 %v285, 16
        %v390 = vrot.slane %v388, 4
        %v391 = vor.u32 %v390, %v386
        %v392 = vrot.slane %v391, 4
        %v394 = vshll.u32 %v286, 16
        %v396 = vrot.slane %v394, 5
        %v397 = vsel %vm301, %v392, %v396
        %v399 = vshrl.u32 %v287, 16
        %v401 = vrot.slane %v399, 4
        %v402 = vshll.u32 %v287, 16
        %v404 = vrot.slane %v402, 5
        %v405 = vor.u32 %v401, %v404
        %v406 = vrot.slane %v405, 4
        %v408 = vshll.u32 %v288, 16
        %v410 = vrot.slane %v408, 5
        %v411 = vsel %vm301, %v406, %v410
        %v412 = vshrl.u32 %v288, 16
        %v414 = vrot.slane %v412, 4
        %v415 = vor.u32 %v414, %v410
        %v416 = vrot.slane %v415, 4
        %v418 = vshll.u32 %v289, 16
        %v420 = vrot.slane %v418, 5
        %v421 = vsel %vm301, %v416, %v420
        %v423 = vshrl.u32 %v290, 16
        %v425 = vrot.slane %v423, 4
        %v426 = vshll.u32 %v290, 16
        %v428 = vrot.slane %v426, 5
        %v429 = vor.u32 %v425, %v428
        %v430 = vrot.slane %v429, 4
        %v432 = vshll.u32 %v291, 16
        %v434 = vrot.slane %v432, 5
        %v435 = vsel %vm301, %v430, %v434
        %v436 = vshrl.u32 %v291, 16
        %v438 = vrot.slane %v436, 4
        %v439 = vor.u32 %v438, %v434
        %v440 = vrot.slane %v439, 4
        %v442 = vshll.u32 %v292, 16
        %v444 = vrot.slane %v442, 5
        %v445 = vsel %vm301, %v440, %v444
        %v447 = vshrl.u32 %v293, 16
        %v449 = vrot.slane %v447, 4
        %v450 = vshll.u32 %v293, 16
        %v452 = vrot.slane %v450, 5
        %v453 = vor.u32 %v449, %v452
        %v454 = vrot.slane %v453, 4
        %v456 = vshll.u32 %v294, 16
        %v458 = vrot.slane %v456, 5
        %v459 = vsel %vm301, %v454, %v458
        %v460 = vshrl.u32 %v294, 16
        %v462 = vrot.slane %v460, 4
        %v463 = vor.u32 %v462, %v458
        %v464 = vrot.slane %v463, 4
        %v466 = vshll.u32 %v295, 16
        %v468 = vrot.slane %v466, 5
        %v469 = vsel %vm301, %v464, %v468
        %v471 = vshrl.u32 %v296, 16
        %v473 = vrot.slane %v471, 4
        %v474 = vshll.u32 %v296, 16
        %v476 = vrot.slane %v474, 5
        %v477 = vor.u32 %v473, %v476
        %v478 = vrot.slane %v477, 4
        %v480 = vshll.u32 %v297, 16
        %v482 = vrot.slane %v480, 5
        %v483 = vsel %vm301, %v478, %v482
        %v484 = vshrl.u32 %v297, 16
        %v486 = vrot.slane %v484, 4
        %v487 = vor.u32 %v486, %v482
        %v488 = vrot.slane %v487, 4
        %v490 = vshll.u32 %v298, 16
        %v492 = vrot.slane %v490, 5
        %v493 = vsel %vm301, %v488, %v492
        %494 = vrot.lane.b32.xlu0 %v315, 64
        %v495 = vpop.permute.xlu0 %494
        %496 = vrot.lane.b32.xlu0 %v325, 64
        %v497 = vpop.permute.xlu0 %496
        %498 = vrot.lane.b32.xlu0 %v339, 64
        %v499 = vpop.permute.xlu0 %498
        %500 = vrot.lane.b32.xlu0 %v349, 64
        %v501 = vpop.permute.xlu0 %500
        %502 = vrot.lane.b32.xlu0 %v363, 64
        %v503 = vpop.permute.xlu0 %502
        %504 = vrot.lane.b32.xlu0 %v373, 64
        %v505 = vpop.permute.xlu0 %504
        %506 = vrot.lane.b32.xlu0 %v387, 64
        %v507 = vpop.permute.xlu0 %506
        %508 = vrot.lane.b32.xlu0 %v397, 64
        %v509 = vpop.permute.xlu0 %508
        %510 = vrot.lane.b32.xlu0 %v411, 64
        %v511 = vpop.permute.xlu0 %510
        %512 = vrot.lane.b32.xlu0 %v421, 64
        %v513 = vpop.permute.xlu0 %512
        %514 = vrot.lane.b32.xlu0 %v435, 64
        %v515 = vpop.permute.xlu0 %514
        %516 = vrot.lane.b32.xlu0 %v445, 64
        %v517 = vpop.permute.xlu0 %516
        %518 = vrot.lane.b32.xlu0 %v459, 64
        %v519 = vpop.permute.xlu0 %518
        %520 = vrot.lane.b32.xlu0 %v469, 64
        %v521 = vpop.permute.xlu0 %520
        %522 = vrot.lane.b32.xlu0 %v483, 64
        %v523 = vpop.permute.xlu0 %522
        %524 = vrot.lane.b32.xlu0 %v493, 64
        %v525 = vpop.permute.xlu0 %524
        %vm542 = vcmask 1043968
        %543 = vst.msk [vmem:[#allocation2] sm:$0xf] %vm542, %v495
        %544 = vst.msk [vmem:[#allocation2 + $0x14] sm:$0xf] %vm542, %v497
        %545 = vst.msk [vmem:[#allocation2 + $0x28] sm:$0xf] %vm542, %v499
        %546 = vst.msk [vmem:[#allocation2 + $0x3c] sm:$0xf] %vm542, %v501
        %547 = vst.msk [vmem:[#allocation2 + $0x50] sm:$0xf] %vm542, %v503
        %548 = vst.msk [vmem:[#allocation2 + $0x64] sm:$0xf] %vm542, %v505
        %549 = vst.msk [vmem:[#allocation2 + $0x78] sm:$0xf] %vm542, %v507
        %550 = vst.msk [vmem:[#allocation2 + $0x8c] sm:$0xf] %vm542, %v509
        %551 = vst.msk [vmem:[#allocation2 + $0xa0] sm:$0xf] %vm542, %v511
        %552 = vst.msk [vmem:[#allocation2 + $0xb4] sm:$0xf] %vm542, %v513
        %553 = vst.msk [vmem:[#allocation2 + $0xc8] sm:$0xf] %vm542, %v515
        %554 = vst.msk [vmem:[#allocation2 + $0xdc] sm:$0xf] %vm542, %v517
        %555 = vst.msk [vmem:[#allocation2 + $0xf0] sm:$0xf] %vm542, %v519
        %556 = vst.msk [vmem:[#allocation2 + $0x104] sm:$0xf] %vm542, %v521
        %557 = vst.msk [vmem:[#allocation2 + $0x118] sm:$0xf] %vm542, %v523
        %558 = vst.msk [vmem:[#allocation2 + $0x12c] sm:$0xf] %vm542, %v525
        %v559 = vld [vmem:[%s241] sm:$0xe]
        %v560 = vld [vmem:[%s241 + $0x4] sm:$0xf]
        %v561 = vld [vmem:[%s241 + $0x8] sm:$0x1]
        %v562 = vld [vmem:[%s241 + $0xc] sm:$0xe]
        %v563 = vld [vmem:[%s241 + $0x10] sm:$0xf]
        %v564 = vld [vmem:[%s241 + $0x14] sm:$0x1]
        %v565 = vld [vmem:[%s241 + $0x18] sm:$0xe]
        %v566 = vld [vmem:[%s241 + $0x1c] sm:$0xf]
        %v567 = vld [vmem:[%s241 + $0x20] sm:$0x1]
        %v568 = vld [vmem:[%s241 + $0x24] sm:$0xe]
        %v569 = vld [vmem:[%s241 + $0x28] sm:$0xf]
        %v570 = vld [vmem:[%s241 + $0x2c] sm:$0x1]
        %v571 = vld [vmem:[%s241 + $0x30] sm:$0xe]
        %v572 = vld [vmem:[%s241 + $0x34] sm:$0xf]
        %v573 = vld [vmem:[%s241 + $0x38] sm:$0x1]
        %v574 = vld [vmem:[%s241 + $0x3c] sm:$0xe]
        %v575 = vld [vmem:[%s241 + $0x40] sm:$0xf]
        %v576 = vld [vmem:[%s241 + $0x44] sm:$0x1]
        %v577 = vld [vmem:[%s241 + $0x48] sm:$0xe]
        %v578 = vld [vmem:[%s241 + $0x4c] sm:$0xf]
        %v579 = vld [vmem:[%s241 + $0x50] sm:$0x1]
        %v580 = vld [vmem:[%s241 + $0x54] sm:$0xe]
        %v581 = vld [vmem:[%s241 + $0x58] sm:$0xf]
        %v582 = vld [vmem:[%s241 + $0x5c] sm:$0x1]
        %vm607 = vcmask 1042432
        %vm608 = vcmask 1046532
        %vm609 = vmor %vm607, %vm608
        %v610 = vrot.slane %v559, 5
        %v611 = vrot.slane %v610, 4
        %v612 = vrot.slane %v560, 5
        %v613 = vsel %vm609, %v611, %v612
        %v614 = vrot.slane %v612, 4
        %v615 = vrot.slane %v561, 5
        %v616 = vsel %vm609, %v614, %v615
        %v617 = vrot.slane %v562, 5
        %v618 = vrot.slane %v617, 4
        %v619 = vrot.slane %v563, 5
        %v620 = vsel %vm609, %v618, %v619
        %v621 = vrot.slane %v619, 4
        %v622 = vrot.slane %v564, 5
        %v623 = vsel %vm609, %v621, %v622
        %v624 = vrot.slane %v565, 5
        %v625 = vrot.slane %v624, 4
        %v626 = vrot.slane %v566, 5
        %v627 = vsel %vm609, %v625, %v626
        %v628 = vrot.slane %v626, 4
        %v629 = vrot.slane %v567, 5
        %v630 = vsel %vm609, %v628, %v629
        %v631 = vrot.slane %v568, 5
        %v632 = vrot.slane %v631, 4
        %v633 = vrot.slane %v569, 5
        %v634 = vsel %vm609, %v632, %v633
        %v635 = vrot.slane %v633, 4
        %v636 = vrot.slane %v570, 5
        %v637 = vsel %vm609, %v635, %v636
        %v638 = vrot.slane %v571, 5
        %v639 = vrot.slane %v638, 4
        %v640 = vrot.slane %v572, 5
        %v641 = vsel %vm609, %v639, %v640
        %v642 = vrot.slane %v640, 4
        %v643 = vrot.slane %v573, 5
        %v644 = vsel %vm609, %v642, %v643
        %v645 = vrot.slane %v574, 5
        %v646 = vrot.slane %v645, 4
        %v647 = vrot.slane %v575, 5
        %v648 = vsel %vm609, %v646, %v647
        %v649 = vrot.slane %v647, 4
        %v650 = vrot.slane %v576, 5
        %v651 = vsel %vm609, %v649, %v650
        %v652 = vrot.slane %v577, 5
        %v653 = vrot.slane %v652, 4
        %v654 = vrot.slane %v578, 5
        %v655 = vsel %vm609, %v653, %v654
        %v656 = vrot.slane %v654, 4
        %v657 = vrot.slane %v579, 5
        %v658 = vsel %vm609, %v656, %v657
        %v659 = vrot.slane %v580, 5
        %v660 = vrot.slane %v659, 4
        %v661 = vrot.slane %v581, 5
        %v662 = vsel %vm609, %v660, %v661
        %v663 = vrot.slane %v661, 4
        %v664 = vrot.slane %v582, 5
        %v665 = vsel %vm609, %v663, %v664
        %682 = vst.msk [vmem:[#allocation2 + $0x4] sm:$0xf] %vm258, %v613
        %683 = vst.msk [vmem:[#allocation2 + $0x18] sm:$0xf] %vm258, %v616
        %684 = vst.msk [vmem:[#allocation2 + $0x2c] sm:$0xf] %vm258, %v620
        %685 = vst.msk [vmem:[#allocation2 + $0x40] sm:$0xf] %vm258, %v623
        %686 = vst.msk [vmem:[#allocation2 + $0x54] sm:$0xf] %vm258, %v627
        %687 = vst.msk [vmem:[#allocation2 + $0x68] sm:$0xf] %vm258, %v630
        %688 = vst.msk [vmem:[#allocation2 + $0x7c] sm:$0xf] %vm258, %v634
        %689 = vst.msk [vmem:[#allocation2 + $0x90] sm:$0xf] %vm258, %v637
        %690 = vst.msk [vmem:[#allocation2 + $0xa4] sm:$0xf] %vm258, %v641
        %691 = vst.msk [vmem:[#allocation2 + $0xb8] sm:$0xf] %vm258, %v644
        %692 = vst.msk [vmem:[#allocation2 + $0xcc] sm:$0xf] %vm258, %v648
        %693 = vst.msk [vmem:[#allocation2 + $0xe0] sm:$0xf] %vm258, %v651
        %694 = vst.msk [vmem:[#allocation2 + $0xf4] sm:$0xf] %vm258, %v655
        %695 = vst.msk [vmem:[#allocation2 + $0x108] sm:$0xf] %vm258, %v658
        %696 = vst.msk [vmem:[#allocation2 + $0x11c] sm:$0xf] %vm258, %v662
        %697 = vst.msk [vmem:[#allocation2 + $0x130] sm:$0xf] %vm258, %v665
        %s698 = sadd.s32 %s238, 1
        %s699 = smul.u32 %s698, 3
        %s700 = smul.addr %s699, 4
        %s701 = scalar_lea.vmem %s225, %s700
        %v702 = vld [vmem:[%s701] sm:$0xf]
        %v703 = vld [vmem:[%s701 + $0x4] sm:$0xf]
        %v704 = vld [vmem:[%s701 + $0xc] sm:$0xf]
        %v705 = vld [vmem:[%s701 + $0x10] sm:$0xf]
        %v706 = vld [vmem:[%s701 + $0x18] sm:$0xf]
        %v707 = vld [vmem:[%s701 + $0x1c] sm:$0xf]
        %v708 = vld [vmem:[%s701 + $0x24] sm:$0xf]
        %v709 = vld [vmem:[%s701 + $0x28] sm:$0xf]
        %v710 = vld [vmem:[%s701 + $0x30] sm:$0xf]
        %v711 = vld [vmem:[%s701 + $0x34] sm:$0xf]
        %v712 = vld [vmem:[%s701 + $0x3c] sm:$0xf]
        %v713 = vld [vmem:[%s701 + $0x40] sm:$0xf]
        %v714 = vld [vmem:[%s701 + $0x48] sm:$0xf]
        %v715 = vld [vmem:[%s701 + $0x4c] sm:$0xf]
        %v716 = vld [vmem:[%s701 + $0x54] sm:$0xf]
        %v717 = vld [vmem:[%s701 + $0x58] sm:$0xf]
        %734 = vrot.lane.b32.xlu0 %v702, 64
        %v735 = vpop.permute.xlu0 %734
        %736 = vrot.lane.b32.xlu0 %v703, 64
        %v737 = vpop.permute.xlu0 %736
        %738 = vrot.lane.b32.xlu0 %v704, 64
        %v739 = vpop.permute.xlu0 %738
        %740 = vrot.lane.b32.xlu0 %v705, 64
        %v741 = vpop.permute.xlu0 %740
        %742 = vrot.lane.b32.xlu0 %v706, 64
        %v743 = vpop.permute.xlu0 %742
        %744 = vrot.lane.b32.xlu0 %v707, 64
        %v745 = vpop.permute.xlu0 %744
        %746 = vrot.lane.b32.xlu0 %v708, 64
        %v747 = vpop.permute.xlu0 %746
        %748 = vrot.lane.b32.xlu0 %v709, 64
        %v749 = vpop.permute.xlu0 %748
        %750 = vrot.lane.b32.xlu0 %v710, 64
        %v751 = vpop.permute.xlu0 %750
        %752 = vrot.lane.b32.xlu0 %v711, 64
        %v753 = vpop.permute.xlu0 %752
        %754 = vrot.lane.b32.xlu0 %v712, 64
        %v755 = vpop.permute.xlu0 %754
        %756 = vrot.lane.b32.xlu0 %v713, 64
        %v757 = vpop.permute.xlu0 %756
        %758 = vrot.lane.b32.xlu0 %v714, 64
        %v759 = vpop.permute.xlu0 %758
        %760 = vrot.lane.b32.xlu0 %v715, 64
        %v761 = vpop.permute.xlu0 %760
        %762 = vrot.lane.b32.xlu0 %v716, 64
        %v763 = vpop.permute.xlu0 %762
        %764 = vrot.lane.b32.xlu0 %v717, 64
        %v765 = vpop.permute.xlu0 %764
        %782 = vst.msk [vmem:[#allocation2 + $0x4] sm:$0xf] %vm542, %v735
        %783 = vst.msk [vmem:[#allocation2 + $0x18] sm:$0xf] %vm542, %v737
        %784 = vst.msk [vmem:[#allocation2 + $0x2c] sm:$0xf] %vm542, %v739
        %785 = vst.msk [vmem:[#allocation2 + $0x40] sm:$0xf] %vm542, %v741
        %786 = vst.msk [vmem:[#allocation2 + $0x54] sm:$0xf] %vm542, %v743
        %787 = vst.msk [vmem:[#allocation2 + $0x68] sm:$0xf] %vm542, %v745
        %788 = vst.msk [vmem:[#allocation2 + $0x7c] sm:$0xf] %vm542, %v747
        %789 = vst.msk [vmem:[#allocation2 + $0x90] sm:$0xf] %vm542, %v749
        %790 = vst.msk [vmem:[#allocation2 + $0xa4] sm:$0xf] %vm542, %v751
        %791 = vst.msk [vmem:[#allocation2 + $0xb8] sm:$0xf] %vm542, %v753
        %792 = vst.msk [vmem:[#allocation2 + $0xcc] sm:$0xf] %vm542, %v755
        %793 = vst.msk [vmem:[#allocation2 + $0xe0] sm:$0xf] %vm542, %v757
        %794 = vst.msk [vmem:[#allocation2 + $0xf4] sm:$0xf] %vm542, %v759
        %795 = vst.msk [vmem:[#allocation2 + $0x108] sm:$0xf] %vm542, %v761
        %796 = vst.msk [vmem:[#allocation2 + $0x11c] sm:$0xf] %vm542, %v763
        %797 = vst.msk [vmem:[#allocation2 + $0x130] sm:$0xf] %vm542, %v765
        %v798 = vld [vmem:[%s701] sm:$0xf]
        %v799 = vld [vmem:[%s701 + $0x4] sm:$0xf]
        %v800 = vld [vmem:[%s701 + $0x8] sm:$0x1]
        %v801 = vld [vmem:[%s701 + $0xc] sm:$0xf]
        %v802 = vld [vmem:[%s701 + $0x10] sm:$0xf]
        %v803 = vld [vmem:[%s701 + $0x14] sm:$0x1]
        %v804 = vld [vmem:[%s701 + $0x18] sm:$0xf]
        %v805 = vld [vmem:[%s701 + $0x1c] sm:$0xf]
        %v806 = vld [vmem:[%s701 + $0x20] sm:$0x1]
        %v807 = vld [vmem:[%s701 + $0x24] sm:$0xf]
        %v808 = vld [vmem:[%s701 + $0x28] sm:$0xf]
        %v809 = vld [vmem:[%s701 + $0x2c] sm:$0x1]
        %v810 = vld [vmem:[%s701 + $0x30] sm:$0xf]
        %v811 = vld [vmem:[%s701 + $0x34] sm:$0xf]
        %v812 = vld [vmem:[%s701 + $0x38] sm:$0x1]
        %v813 = vld [vmem:[%s701 + $0x3c] sm:$0xf]
        %v814 = vld [vmem:[%s701 + $0x40] sm:$0xf]
        %v815 = vld [vmem:[%s701 + $0x44] sm:$0x1]
        %v816 = vld [vmem:[%s701 + $0x48] sm:$0xf]
        %v817 = vld [vmem:[%s701 + $0x4c] sm:$0xf]
        %v818 = vld [vmem:[%s701 + $0x50] sm:$0x1]
        %v819 = vld [vmem:[%s701 + $0x54] sm:$0xf]
        %v820 = vld [vmem:[%s701 + $0x58] sm:$0xf]
        %v821 = vld [vmem:[%s701 + $0x5c] sm:$0x1]
        %v823 = vshrl.u32 %v798, 16
        %v825 = vrot.slane %v823, 4
        %v826 = vshll.u32 %v798, 16
        %v828 = vrot.slane %v826, 5
        %v829 = vor.u32 %v825, %v828
        %v830 = vrot.slane %v829, 4
        %v832 = vshll.u32 %v799, 16
        %v834 = vrot.slane %v832, 5
        %v835 = vsel %vm301, %v830, %v834
        %v836 = vshrl.u32 %v799, 16
        %v838 = vrot.slane %v836, 4
        %v839 = vor.u32 %v838, %v834
        %v840 = vrot.slane %v839, 4
        %v842 = vshll.u32 %v800, 16
        %v844 = vrot.slane %v842, 5
        %v845 = vsel %vm301, %v840, %v844
        %v847 = vshrl.u32 %v801, 16
        %v849 = vrot.slane %v847, 4
        %v850 = vshll.u32 %v801, 16
        %v852 = vrot.slane %v850, 5
        %v853 = vor.u32 %v849, %v852
        %v854 = vrot.slane %v853, 4
        %v856 = vshll.u32 %v802, 16
        %v858 = vrot.slane %v856, 5
        %v859 = vsel %vm301, %v854, %v858
        %v860 = vshrl.u32 %v802, 16
        %v862 = vrot.slane %v860, 4
        %v863 = vor.u32 %v862, %v858
        %v864 = vrot.slane %v863, 4
        %v866 = vshll.u32 %v803, 16
        %v868 = vrot.slane %v866, 5
        %v869 = vsel %vm301, %v864, %v868
        %v871 = vshrl.u32 %v804, 16
        %v873 = vrot.slane %v871, 4
        %v874 = vshll.u32 %v804, 16
        %v876 = vrot.slane %v874, 5
        %v877 = vor.u32 %v873, %v876
        %v878 = vrot.slane %v877, 4
        %v880 = vshll.u32 %v805, 16
        %v882 = vrot.slane %v880, 5
        %v883 = vsel %vm301, %v878, %v882
        %v884 = vshrl.u32 %v805, 16
        %v886 = vrot.slane %v884, 4
        %v887 = vor.u32 %v886, %v882
        %v888 = vrot.slane %v887, 4
        %v890 = vshll.u32 %v806, 16
        %v892 = vrot.slane %v890, 5
        %v893 = vsel %vm301, %v888, %v892
        %v895 = vshrl.u32 %v807, 16
        %v897 = vrot.slane %v895, 4
        %v898 = vshll.u32 %v807, 16
        %v900 = vrot.slane %v898, 5
        %v901 = vor.u32 %v897, %v900
        %v902 = vrot.slane %v901, 4
        %v904 = vshll.u32 %v808, 16
        %v906 = vrot.slane %v904, 5
        %v907 = vsel %vm301, %v902, %v906
        %v908 = vshrl.u32 %v808, 16
        %v910 = vrot.slane %v908, 4
        %v911 = vor.u32 %v910, %v906
        %v912 = vrot.slane %v911, 4
        %v914 = vshll.u32 %v809, 16
        %v916 = vrot.slane %v914, 5
        %v917 = vsel %vm301, %v912, %v916
        %v919 = vshrl.u32 %v810, 16
        %v921 = vrot.slane %v919, 4
        %v922 = vshll.u32 %v810, 16
        %v924 = vrot.slane %v922, 5
        %v925 = vor.u32 %v921, %v924
        %v926 = vrot.slane %v925, 4
        %v928 = vshll.u32 %v811, 16
        %v930 = vrot.slane %v928, 5
        %v931 = vsel %vm301, %v926, %v930
        %v932 = vshrl.u32 %v811, 16
        %v934 = vrot.slane %v932, 4
        %v935 = vor.u32 %v934, %v930
        %v936 = vrot.slane %v935, 4
        %v938 = vshll.u32 %v812, 16
        %v940 = vrot.slane %v938, 5
        %v941 = vsel %vm301, %v936, %v940
        %v943 = vshrl.u32 %v813, 16
        %v945 = vrot.slane %v943, 4
        %v946 = vshll.u32 %v813, 16
        %v948 = vrot.slane %v946, 5
        %v949 = vor.u32 %v945, %v948
        %v950 = vrot.slane %v949, 4
        %v952 = vshll.u32 %v814, 16
        %v954 = vrot.slane %v952, 5
        %v955 = vsel %vm301, %v950, %v954
        %v956 = vshrl.u32 %v814, 16
        %v958 = vrot.slane %v956, 4
        %v959 = vor.u32 %v958, %v954
        %v960 = vrot.slane %v959, 4
        %v962 = vshll.u32 %v815, 16
        %v964 = vrot.slane %v962, 5
        %v965 = vsel %vm301, %v960, %v964
        %v967 = vshrl.u32 %v816, 16
        %v969 = vrot.slane %v967, 4
        %v970 = vshll.u32 %v816, 16
        %v972 = vrot.slane %v970, 5
        %v973 = vor.u32 %v969, %v972
        %v974 = vrot.slane %v973, 4
        %v976 = vshll.u32 %v817, 16
        %v978 = vrot.slane %v976, 5
        %v979 = vsel %vm301, %v974, %v978
        %v980 = vshrl.u32 %v817, 16
        %v982 = vrot.slane %v980, 4
        %v983 = vor.u32 %v982, %v978
        %v984 = vrot.slane %v983, 4
        %v986 = vshll.u32 %v818, 16
        %v988 = vrot.slane %v986, 5
        %v989 = vsel %vm301, %v984, %v988
        %v991 = vshrl.u32 %v819, 16
        %v993 = vrot.slane %v991, 4
        %v994 = vshll.u32 %v819, 16
        %v996 = vrot.slane %v994, 5
        %v997 = vor.u32 %v993, %v996
        %v998 = vrot.slane %v997, 4
        %v1000 = vshll.u32 %v820, 16
        %v1002 = vrot.slane %v1000, 5
        %v1003 = vsel %vm301, %v998, %v1002
        %v1004 = vshrl.u32 %v820, 16
        %v1006 = vrot.slane %v1004, 4
        %v1007 = vor.u32 %v1006, %v1002
        %v1008 = vrot.slane %v1007, 4
        %v1010 = vshll.u32 %v821, 16
        %v1012 = vrot.slane %v1010, 5
        %v1013 = vsel %vm301, %v1008, %v1012
        %1030 = vst.msk [vmem:[#allocation2 + $0x8] sm:$0xf] %vm258, %v835
        %1031 = vst.msk [vmem:[#allocation2 + $0x1c] sm:$0xf] %vm258, %v845
        %1032 = vst.msk [vmem:[#allocation2 + $0x30] sm:$0xf] %vm258, %v859
        %1033 = vst.msk [vmem:[#allocation2 + $0x44] sm:$0xf] %vm258, %v869
        %1034 = vst.msk [vmem:[#allocation2 + $0x58] sm:$0xf] %vm258, %v883
        %1035 = vst.msk [vmem:[#allocation2 + $0x6c] sm:$0xf] %vm258, %v893
        %1036 = vst.msk [vmem:[#allocation2 + $0x80] sm:$0xf] %vm258, %v907
        %1037 = vst.msk [vmem:[#allocation2 + $0x94] sm:$0xf] %vm258, %v917
        %1038 = vst.msk [vmem:[#allocation2 + $0xa8] sm:$0xf] %vm258, %v931
        %1039 = vst.msk [vmem:[#allocation2 + $0xbc] sm:$0xf] %vm258, %v941
        %1040 = vst.msk [vmem:[#allocation2 + $0xd0] sm:$0xf] %vm258, %v955
        %1041 = vst.msk [vmem:[#allocation2 + $0xe4] sm:$0xf] %vm258, %v965
        %1042 = vst.msk [vmem:[#allocation2 + $0xf8] sm:$0xf] %vm258, %v979
        %1043 = vst.msk [vmem:[#allocation2 + $0x10c] sm:$0xf] %vm258, %v989
        %1044 = vst.msk [vmem:[#allocation2 + $0x120] sm:$0xf] %vm258, %v1003
        %1045 = vst.msk [vmem:[#allocation2 + $0x134] sm:$0xf] %vm258, %v1013
        %v1046 = vld [vmem:[%s701] sm:$0xe]
        %v1047 = vld [vmem:[%s701 + $0x4] sm:$0xf]
        %v1048 = vld [vmem:[%s701 + $0x8] sm:$0x1]
        %v1049 = vld [vmem:[%s701 + $0xc] sm:$0xe]
        %v1050 = vld [vmem:[%s701 + $0x10] sm:$0xf]
        %v1051 = vld [vmem:[%s701 + $0x14] sm:$0x1]
        %v1052 = vld [vmem:[%s701 + $0x18] sm:$0xe]
        %v1053 = vld [vmem:[%s701 + $0x1c] sm:$0xf]
        %v1054 = vld [vmem:[%s701 + $0x20] sm:$0x1]
        %v1055 = vld [vmem:[%s701 + $0x24] sm:$0xe]
        %v1056 = vld [vmem:[%s701 + $0x28] sm:$0xf]
        %v1057 = vld [vmem:[%s701 + $0x2c] sm:$0x1]
        %v1058 = vld [vmem:[%s701 + $0x30] sm:$0xe]
        %v1059 = vld [vmem:[%s701 + $0x34] sm:$0xf]
        %v1060 = vld [vmem:[%s701 + $0x38] sm:$0x1]
        %v1061 = vld [vmem:[%s701 + $0x3c] sm:$0xe]
        %v1062 = vld [vmem:[%s701 + $0x40] sm:$0xf]
        %v1063 = vld [vmem:[%s701 + $0x44] sm:$0x1]
        %v1064 = vld [vmem:[%s701 + $0x48] sm:$0xe]
        %v1065 = vld [vmem:[%s701 + $0x4c] sm:$0xf]
        %v1066 = vld [vmem:[%s701 + $0x50] sm:$0x1]
        %v1067 = vld [vmem:[%s701 + $0x54] sm:$0xe]
        %v1068 = vld [vmem:[%s701 + $0x58] sm:$0xf]
        %v1069 = vld [vmem:[%s701 + $0x5c] sm:$0x1]
        %v1094 = vrot.slane %v1046, 5
        %v1095 = vrot.slane %v1094, 4
        %v1096 = vrot.slane %v1047, 5
        %v1097 = vsel %vm609, %v1095, %v1096
        %v1098 = vrot.slane %v1096, 4
        %v1099 = vrot.slane %v1048, 5
        %v1100 = vsel %vm609, %v1098, %v1099
        %v1101 = vrot.slane %v1049, 5
        %v1102 = vrot.slane %v1101, 4
        %v1103 = vrot.slane %v1050, 5
        %v1104 = vsel %vm609, %v1102, %v1103
        %v1105 = vrot.slane %v1103, 4
        %v1106 = vrot.slane %v1051, 5
        %v1107 = vsel %vm609, %v1105, %v1106
        %v1108 = vrot.slane %v1052, 5
        %v1109 = vrot.slane %v1108, 4
        %v1110 = vrot.slane %v1053, 5
        %v1111 = vsel %vm609, %v1109, %v1110
        %v1112 = vrot.slane %v1110, 4
        %v1113 = vrot.slane %v1054, 5
        %v1114 = vsel %vm609, %v1112, %v1113
        %v1115 = vrot.slane %v1055, 5
        %v1116 = vrot.slane %v1115, 4
        %v1117 = vrot.slane %v1056, 5
        %v1118 = vsel %vm609, %v1116, %v1117
        %v1119 = vrot.slane %v1117, 4
        %v1120 = vrot.slane %v1057, 5
        %v1121 = vsel %vm609, %v1119, %v1120
        %v1122 = vrot.slane %v1058, 5
        %v1123 = vrot.slane %v1122, 4
        %v1124 = vrot.slane %v1059, 5
        %v1125 = vsel %vm609, %v1123, %v1124
        %v1126 = vrot.slane %v1124, 4
        %v1127 = vrot.slane %v1060, 5
        %v1128 = vsel %vm609, %v1126, %v1127
        %v1129 = vrot.slane %v1061, 5
        %v1130 = vrot.slane %v1129, 4
        %v1131 = vrot.slane %v1062, 5
        %v1132 = vsel %vm609, %v1130, %v1131
        %v1133 = vrot.slane %v1131, 4
        %v1134 = vrot.slane %v1063, 5
        %v1135 = vsel %vm609, %v1133, %v1134
        %v1136 = vrot.slane %v1064, 5
        %v1137 = vrot.slane %v1136, 4
        %v1138 = vrot.slane %v1065, 5
        %v1139 = vsel %vm609, %v1137, %v1138
        %v1140 = vrot.slane %v1138, 4
        %v1141 = vrot.slane %v1066, 5
        %v1142 = vsel %vm609, %v1140, %v1141
        %v1143 = vrot.slane %v1067, 5
        %v1144 = vrot.slane %v1143, 4
        %v1145 = vrot.slane %v1068, 5
        %v1146 = vsel %vm609, %v1144, %v1145
        %v1147 = vrot.slane %v1145, 4
        %v1148 = vrot.slane %v1069, 5
        %v1149 = vsel %vm609, %v1147, %v1148
        %1150 = vrot.lane.b32.xlu0 %v1097, 64
        %v1151 = vpop.permute.xlu0 %1150
        %1152 = vrot.lane.b32.xlu0 %v1100, 64
        %v1153 = vpop.permute.xlu0 %1152
        %1154 = vrot.lane.b32.xlu0 %v1104, 64
        %v1155 = vpop.permute.xlu0 %1154
        %1156 = vrot.lane.b32.xlu0 %v1107, 64
        %v1157 = vpop.permute.xlu0 %1156
        %1158 = vrot.lane.b32.xlu0 %v1111, 64
        %v1159 = vpop.permute.xlu0 %1158
        %1160 = vrot.lane.b32.xlu0 %v1114, 64
        %v1161 = vpop.permute.xlu0 %1160
        %1162 = vrot.lane.b32.xlu0 %v1118, 64
        %v1163 = vpop.permute.xlu0 %1162
        %1164 = vrot.lane.b32.xlu0 %v1121, 64
        %v1165 = vpop.permute.xlu0 %1164
        %1166 = vrot.lane.b32.xlu0 %v1125, 64
        %v1167 = vpop.permute.xlu0 %1166
        %1168 = vrot.lane.b32.xlu0 %v1128, 64
        %v1169 = vpop.permute.xlu0 %1168
        %1170 = vrot.lane.b32.xlu0 %v1132, 64
        %v1171 = vpop.permute.xlu0 %1170
        %1172 = vrot.lane.b32.xlu0 %v1135, 64
        %v1173 = vpop.permute.xlu0 %1172
        %1174 = vrot.lane.b32.xlu0 %v1139, 64
        %v1175 = vpop.permute.xlu0 %1174
        %1176 = vrot.lane.b32.xlu0 %v1142, 64
        %v1177 = vpop.permute.xlu0 %1176
        %1178 = vrot.lane.b32.xlu0 %v1146, 64
        %v1179 = vpop.permute.xlu0 %1178
        %1180 = vrot.lane.b32.xlu0 %v1149, 64
        %v1181 = vpop.permute.xlu0 %1180
        %1198 = vst.msk [vmem:[#allocation2 + $0x8] sm:$0xf] %vm542, %v1151
        %1199 = vst.msk [vmem:[#allocation2 + $0x1c] sm:$0xf] %vm542, %v1153
        %1200 = vst.msk [vmem:[#allocation2 + $0x30] sm:$0xf] %vm542, %v1155
        %1201 = vst.msk [vmem:[#allocation2 + $0x44] sm:$0xf] %vm542, %v1157
        %1202 = vst.msk [vmem:[#allocation2 + $0x58] sm:$0xf] %vm542, %v1159
        %1203 = vst.msk [vmem:[#allocation2 + $0x6c] sm:$0xf] %vm542, %v1161
        %1204 = vst.msk [vmem:[#allocation2 + $0x80] sm:$0xf] %vm542, %v1163
        %1205 = vst.msk [vmem:[#allocation2 + $0x94] sm:$0xf] %vm542, %v1165
        %1206 = vst.msk [vmem:[#allocation2 + $0xa8] sm:$0xf] %vm542, %v1167
        %1207 = vst.msk [vmem:[#allocation2 + $0xbc] sm:$0xf] %vm542, %v1169
        %1208 = vst.msk [vmem:[#allocation2 + $0xd0] sm:$0xf] %vm542, %v1171
        %1209 = vst.msk [vmem:[#allocation2 + $0xe4] sm:$0xf] %vm542, %v1173
        %1210 = vst.msk [vmem:[#allocation2 + $0xf8] sm:$0xf] %vm542, %v1175
        %1211 = vst.msk [vmem:[#allocation2 + $0x10c] sm:$0xf] %vm542, %v1177
        %1212 = vst.msk [vmem:[#allocation2 + $0x120] sm:$0xf] %vm542, %v1179
        %1213 = vst.msk [vmem:[#allocation2 + $0x134] sm:$0xf] %vm542, %v1181
        %s1214 = sadd.s32 %s238, 2
        %s1215 = smul.u32 %s1214, 3
        %s1216 = smul.addr %s1215, 4
        %s1217 = scalar_lea.vmem %s225, %s1216
        %v1218 = vld [vmem:[%s1217] sm:$0xf]
        %v1219 = vld [vmem:[%s1217 + $0x4] sm:$0xf]
        %v1220 = vld [vmem:[%s1217 + $0xc] sm:$0xf]
        %v1221 = vld [vmem:[%s1217 + $0x10] sm:$0xf]
        %v1222 = vld [vmem:[%s1217 + $0x18] sm:$0xf]
        %v1223 = vld [vmem:[%s1217 + $0x1c] sm:$0xf]
        %v1224 = vld [vmem:[%s1217 + $0x24] sm:$0xf]
        %v1225 = vld [vmem:[%s1217 + $0x28] sm:$0xf]
        %v1226 = vld [vmem:[%s1217 + $0x30] sm:$0xf]
        %v1227 = vld [vmem:[%s1217 + $0x34] sm:$0xf]
        %v1228 = vld [vmem:[%s1217 + $0x3c] sm:$0xf]
        %v1229 = vld [vmem:[%s1217 + $0x40] sm:$0xf]
        %v1230 = vld [vmem:[%s1217 + $0x48] sm:$0xf]
        %v1231 = vld [vmem:[%s1217 + $0x4c] sm:$0xf]
        %v1232 = vld [vmem:[%s1217 + $0x54] sm:$0xf]
        %v1233 = vld [vmem:[%s1217 + $0x58] sm:$0xf]
        %1234 = vst.msk [vmem:[#allocation2 + $0xc] sm:$0xf] %vm258, %v1218
        %1235 = vst.msk [vmem:[#allocation2 + $0x20] sm:$0xf] %vm258, %v1219
        %1236 = vst.msk [vmem:[#allocation2 + $0x34] sm:$0xf] %vm258, %v1220
        %1237 = vst.msk [vmem:[#allocation2 + $0x48] sm:$0xf] %vm258, %v1221
        %1238 = vst.msk [vmem:[#allocation2 + $0x5c] sm:$0xf] %vm258, %v1222
        %1239 = vst.msk [vmem:[#allocation2 + $0x70] sm:$0xf] %vm258, %v1223
        %1240 = vst.msk [vmem:[#allocation2 + $0x84] sm:$0xf] %vm258, %v1224
        %1241 = vst.msk [vmem:[#allocation2 + $0x98] sm:$0xf] %vm258, %v1225
        %1242 = vst.msk [vmem:[#allocation2 + $0xac] sm:$0xf] %vm258, %v1226
        %1243 = vst.msk [vmem:[#allocation2 + $0xc0] sm:$0xf] %vm258, %v1227
        %1244 = vst.msk [vmem:[#allocation2 + $0xd4] sm:$0xf] %vm258, %v1228
        %1245 = vst.msk [vmem:[#allocation2 + $0xe8] sm:$0xf] %vm258, %v1229
        %1246 = vst.msk [vmem:[#allocation2 + $0xfc] sm:$0xf] %vm258, %v1230
        %1247 = vst.msk [vmem:[#allocation2 + $0x110] sm:$0xf] %vm258, %v1231
        %1248 = vst.msk [vmem:[#allocation2 + $0x124] sm:$0xf] %vm258, %v1232
        %1249 = vst.msk [vmem:[#allocation2 + $0x138] sm:$0xf] %vm258, %v1233
        %v1250 = vld [vmem:[%s1217] sm:$0xf]
        %v1251 = vld [vmem:[%s1217 + $0x4] sm:$0xf]
        %v1252 = vld [vmem:[%s1217 + $0x8] sm:$0x1]
        %v1253 = vld [vmem:[%s1217 + $0xc] sm:$0xf]
        %v1254 = vld [vmem:[%s1217 + $0x10] sm:$0xf]
        %v1255 = vld [vmem:[%s1217 + $0x14] sm:$0x1]
        %v1256 = vld [vmem:[%s1217 + $0x18] sm:$0xf]
        %v1257 = vld [vmem:[%s1217 + $0x1c] sm:$0xf]
        %v1258 = vld [vmem:[%s1217 + $0x20] sm:$0x1]
        %v1259 = vld [vmem:[%s1217 + $0x24] sm:$0xf]
        %v1260 = vld [vmem:[%s1217 + $0x28] sm:$0xf]
        %v1261 = vld [vmem:[%s1217 + $0x2c] sm:$0x1]
        %v1262 = vld [vmem:[%s1217 + $0x30] sm:$0xf]
        %v1263 = vld [vmem:[%s1217 + $0x34] sm:$0xf]
        %v1264 = vld [vmem:[%s1217 + $0x38] sm:$0x1]
        %v1265 = vld [vmem:[%s1217 + $0x3c] sm:$0xf]
        %v1266 = vld [vmem:[%s1217 + $0x40] sm:$0xf]
        %v1267 = vld [vmem:[%s1217 + $0x44] sm:$0x1]
        %v1268 = vld [vmem:[%s1217 + $0x48] sm:$0xf]
        %v1269 = vld [vmem:[%s1217 + $0x4c] sm:$0xf]
        %v1270 = vld [vmem:[%s1217 + $0x50] sm:$0x1]
        %v1271 = vld [vmem:[%s1217 + $0x54] sm:$0xf]
        %v1272 = vld [vmem:[%s1217 + $0x58] sm:$0xf]
        %v1273 = vld [vmem:[%s1217 + $0x5c] sm:$0x1]
        %v1275 = vshrl.u32 %v1250, 16
        %v1277 = vrot.slane %v1275, 4
        %v1278 = vshll.u32 %v1250, 16
        %v1280 = vrot.slane %v1278, 5
        %v1281 = vor.u32 %v1277, %v1280
        %v1282 = vrot.slane %v1281, 4
        %v1284 = vshll.u32 %v1251, 16
        %v1286 = vrot.slane %v1284, 5
        %v1287 = vsel %vm301, %v1282, %v1286
        %v1288 = vshrl.u32 %v1251, 16
        %v1290 = vrot.slane %v1288, 4
        %v1291 = vor.u32 %v1290, %v1286
        %v1292 = vrot.slane %v1291, 4
        %v1294 = vshll.u32 %v1252, 16
        %v1296 = vrot.slane %v1294, 5
        %v1297 = vsel %vm301, %v1292, %v1296
        %v1299 = vshrl.u32 %v1253, 16
        %v1301 = vrot.slane %v1299, 4
        %v1302 = vshll.u32 %v1253, 16
        %v1304 = vrot.slane %v1302, 5
        %v1305 = vor.u32 %v1301, %v1304
        %v1306 = vrot.slane %v1305, 4
        %v1308 = vshll.u32 %v1254, 16
        %v1310 = vrot.slane %v1308, 5
        %v1311 = vsel %vm301, %v1306, %v1310
        %v1312 = vshrl.u32 %v1254, 16
        %v1314 = vrot.slane %v1312, 4
        %v1315 = vor.u32 %v1314, %v1310
        %v1316 = vrot.slane %v1315, 4
        %v1318 = vshll.u32 %v1255, 16
        %v1320 = vrot.slane %v1318, 5
        %v1321 = vsel %vm301, %v1316, %v1320
        %v1323 = vshrl.u32 %v1256, 16
        %v1325 = vrot.slane %v1323, 4
        %v1326 = vshll.u32 %v1256, 16
        %v1328 = vrot.slane %v1326, 5
        %v1329 = vor.u32 %v1325, %v1328
        %v1330 = vrot.slane %v1329, 4
        %v1332 = vshll.u32 %v1257, 16
        %v1334 = vrot.slane %v1332, 5
        %v1335 = vsel %vm301, %v1330, %v1334
        %v1336 = vshrl.u32 %v1257, 16
        %v1338 = vrot.slane %v1336, 4
        %v1339 = vor.u32 %v1338, %v1334
        %v1340 = vrot.slane %v1339, 4
        %v1342 = vshll.u32 %v1258, 16
        %v1344 = vrot.slane %v1342, 5
        %v1345 = vsel %vm301, %v1340, %v1344
        %v1347 = vshrl.u32 %v1259, 16
        %v1349 = vrot.slane %v1347, 4
        %v1350 = vshll.u32 %v1259, 16
        %v1352 = vrot.slane %v1350, 5
        %v1353 = vor.u32 %v1349, %v1352
        %v1354 = vrot.slane %v1353, 4
        %v1356 = vshll.u32 %v1260, 16
        %v1358 = vrot.slane %v1356, 5
        %v1359 = vsel %vm301, %v1354, %v1358
        %v1360 = vshrl.u32 %v1260, 16
        %v1362 = vrot.slane %v1360, 4
        %v1363 = vor.u32 %v1362, %v1358
        %v1364 = vrot.slane %v1363, 4
        %v1366 = vshll.u32 %v1261, 16
        %v1368 = vrot.slane %v1366, 5
        %v1369 = vsel %vm301, %v1364, %v1368
        %v1371 = vshrl.u32 %v1262, 16
        %v1373 = vrot.slane %v1371, 4
        %v1374 = vshll.u32 %v1262, 16
        %v1376 = vrot.slane %v1374, 5
        %v1377 = vor.u32 %v1373, %v1376
        %v1378 = vrot.slane %v1377, 4
        %v1380 = vshll.u32 %v1263, 16
        %v1382 = vrot.slane %v1380, 5
        %v1383 = vsel %vm301, %v1378, %v1382
        %v1384 = vshrl.u32 %v1263, 16
        %v1386 = vrot.slane %v1384, 4
        %v1387 = vor.u32 %v1386, %v1382
        %v1388 = vrot.slane %v1387, 4
        %v1390 = vshll.u32 %v1264, 16
        %v1392 = vrot.slane %v1390, 5
        %v1393 = vsel %vm301, %v1388, %v1392
        %v1395 = vshrl.u32 %v1265, 16
        %v1397 = vrot.slane %v1395, 4
        %v1398 = vshll.u32 %v1265, 16
        %v1400 = vrot.slane %v1398, 5
        %v1401 = vor.u32 %v1397, %v1400
        %v1402 = vrot.slane %v1401, 4
        %v1404 = vshll.u32 %v1266, 16
        %v1406 = vrot.slane %v1404, 5
        %v1407 = vsel %vm301, %v1402, %v1406
        %v1408 = vshrl.u32 %v1266, 16
        %v1410 = vrot.slane %v1408, 4
        %v1411 = vor.u32 %v1410, %v1406
        %v1412 = vrot.slane %v1411, 4
        %v1414 = vshll.u32 %v1267, 16
        %v1416 = vrot.slane %v1414, 5
        %v1417 = vsel %vm301, %v1412, %v1416
        %v1419 = vshrl.u32 %v1268, 16
        %v1421 = vrot.slane %v1419, 4
        %v1422 = vshll.u32 %v1268, 16
        %v1424 = vrot.slane %v1422, 5
        %v1425 = vor.u32 %v1421, %v1424
        %v1426 = vrot.slane %v1425, 4
        %v1428 = vshll.u32 %v1269, 16
        %v1430 = vrot.slane %v1428, 5
        %v1431 = vsel %vm301, %v1426, %v1430
        %v1432 = vshrl.u32 %v1269, 16
        %v1434 = vrot.slane %v1432, 4
        %v1435 = vor.u32 %v1434, %v1430
        %v1436 = vrot.slane %v1435, 4
        %v1438 = vshll.u32 %v1270, 16
        %v1440 = vrot.slane %v1438, 5
        %v1441 = vsel %vm301, %v1436, %v1440
        %v1443 = vshrl.u32 %v1271, 16
        %v1445 = vrot.slane %v1443, 4
        %v1446 = vshll.u32 %v1271, 16
        %v1448 = vrot.slane %v1446, 5
        %v1449 = vor.u32 %v1445, %v1448
        %v1450 = vrot.slane %v1449, 4
        %v1452 = vshll.u32 %v1272, 16
        %v1454 = vrot.slane %v1452, 5
        %v1455 = vsel %vm301, %v1450, %v1454
        %v1456 = vshrl.u32 %v1272, 16
        %v1458 = vrot.slane %v1456, 4
        %v1459 = vor.u32 %v1458, %v1454
        %v1460 = vrot.slane %v1459, 4
        %v1462 = vshll.u32 %v1273, 16
        %v1464 = vrot.slane %v1462, 5
        %v1465 = vsel %vm301, %v1460, %v1464
        %1466 = vrot.lane.b32.xlu0 %v1287, 64
        %v1467 = vpop.permute.xlu0 %1466
        %1468 = vrot.lane.b32.xlu0 %v1297, 64
        %v1469 = vpop.permute.xlu0 %1468
        %1470 = vrot.lane.b32.xlu0 %v1311, 64
        %v1471 = vpop.permute.xlu0 %1470
        %1472 = vrot.lane.b32.xlu0 %v1321, 64
        %v1473 = vpop.permute.xlu0 %1472
        %1474 = vrot.lane.b32.xlu0 %v1335, 64
        %v1475 = vpop.permute.xlu0 %1474
        %1476 = vrot.lane.b32.xlu0 %v1345, 64
        %v1477 = vpop.permute.xlu0 %1476
        %1478 = vrot.lane.b32.xlu0 %v1359, 64
        %v1479 = vpop.permute.xlu0 %1478
        %1480 = vrot.lane.b32.xlu0 %v1369, 64
        %v1481 = vpop.permute.xlu0 %1480
        %1482 = vrot.lane.b32.xlu0 %v1383, 64
        %v1483 = vpop.permute.xlu0 %1482
        %1484 = vrot.lane.b32.xlu0 %v1393, 64
        %v1485 = vpop.permute.xlu0 %1484
        %1486 = vrot.lane.b32.xlu0 %v1407, 64
        %v1487 = vpop.permute.xlu0 %1486
        %1488 = vrot.lane.b32.xlu0 %v1417, 64
        %v1489 = vpop.permute.xlu0 %1488
        %1490 = vrot.lane.b32.xlu0 %v1431, 64
        %v1491 = vpop.permute.xlu0 %1490
        %1492 = vrot.lane.b32.xlu0 %v1441, 64
        %v1493 = vpop.permute.xlu0 %1492
        %1494 = vrot.lane.b32.xlu0 %v1455, 64
        %v1495 = vpop.permute.xlu0 %1494
        %1496 = vrot.lane.b32.xlu0 %v1465, 64
        %v1497 = vpop.permute.xlu0 %1496
        %1514 = vst.msk [vmem:[#allocation2 + $0xc] sm:$0xf] %vm542, %v1467
        %1515 = vst.msk [vmem:[#allocation2 + $0x20] sm:$0xf] %vm542, %v1469
        %1516 = vst.msk [vmem:[#allocation2 + $0x34] sm:$0xf] %vm542, %v1471
        %1517 = vst.msk [vmem:[#allocation2 + $0x48] sm:$0xf] %vm542, %v1473
        %1518 = vst.msk [vmem:[#allocation2 + $0x5c] sm:$0xf] %vm542, %v1475
        %1519 = vst.msk [vmem:[#allocation2 + $0x70] sm:$0xf] %vm542, %v1477
        %1520 = vst.msk [vmem:[#allocation2 + $0x84] sm:$0xf] %vm542, %v1479
        %1521 = vst.msk [vmem:[#allocation2 + $0x98] sm:$0xf] %vm542, %v1481
        %1522 = vst.msk [vmem:[#allocation2 + $0xac] sm:$0xf] %vm542, %v1483
        %1523 = vst.msk [vmem:[#allocation2 + $0xc0] sm:$0xf] %vm542, %v1485
        %1524 = vst.msk [vmem:[#allocation2 + $0xd4] sm:$0xf] %vm542, %v1487
        %1525 = vst.msk [vmem:[#allocation2 + $0xe8] sm:$0xf] %vm542, %v1489
        %1526 = vst.msk [vmem:[#allocation2 + $0xfc] sm:$0xf] %vm542, %v1491
        %1527 = vst.msk [vmem:[#allocation2 + $0x110] sm:$0xf] %vm542, %v1493
        %1528 = vst.msk [vmem:[#allocation2 + $0x124] sm:$0xf] %vm542, %v1495
        %1529 = vst.msk [vmem:[#allocation2 + $0x138] sm:$0xf] %vm542, %v1497
        %v1530 = vld [vmem:[%s1217] sm:$0xe]
        %v1531 = vld [vmem:[%s1217 + $0x4] sm:$0xf]
        %v1532 = vld [vmem:[%s1217 + $0x8] sm:$0x1]
        %v1533 = vld [vmem:[%s1217 + $0xc] sm:$0xe]
        %v1534 = vld [vmem:[%s1217 + $0x10] sm:$0xf]
        %v1535 = vld [vmem:[%s1217 + $0x14] sm:$0x1]
        %v1536 = vld [vmem:[%s1217 + $0x18] sm:$0xe]
        %v1537 = vld [vmem:[%s1217 + $0x1c] sm:$0xf]
        %v1538 = vld [vmem:[%s1217 + $0x20] sm:$0x1]
        %v1539 = vld [vmem:[%s1217 + $0x24] sm:$0xe]
        %v1540 = vld [vmem:[%s1217 + $0x28] sm:$0xf]
        %v1541 = vld [vmem:[%s1217 + $0x2c] sm:$0x1]
        %v1542 = vld [vmem:[%s1217 + $0x30] sm:$0xe]
        %v1543 = vld [vmem:[%s1217 + $0x34] sm:$0xf]
        %v1544 = vld [vmem:[%s1217 + $0x38] sm:$0x1]
        %v1545 = vld [vmem:[%s1217 + $0x3c] sm:$0xe]
        %v1546 = vld [vmem:[%s1217 + $0x40] sm:$0xf]
        %v1547 = vld [vmem:[%s1217 + $0x44] sm:$0x1]
        %v1548 = vld [vmem:[%s1217 + $0x48] sm:$0xe]
        %v1549 = vld [vmem:[%s1217 + $0x4c] sm:$0xf]
        %v1550 = vld [vmem:[%s1217 + $0x50] sm:$0x1]
        %v1551 = vld [vmem:[%s1217 + $0x54] sm:$0xe]
        %v1552 = vld [vmem:[%s1217 + $0x58] sm:$0xf]
        %v1553 = vld [vmem:[%s1217 + $0x5c] sm:$0x1]
        %v1578 = vrot.slane %v1530, 5
        %v1579 = vrot.slane %v1578, 4
        %v1580 = vrot.slane %v1531, 5
        %v1581 = vsel %vm609, %v1579, %v1580
        %v1582 = vrot.slane %v1580, 4
        %v1583 = vrot.slane %v1532, 5
        %v1584 = vsel %vm609, %v1582, %v1583
        %v1585 = vrot.slane %v1533, 5
        %v1586 = vrot.slane %v1585, 4
        %v1587 = vrot.slane %v1534, 5
        %v1588 = vsel %vm609, %v1586, %v1587
        %v1589 = vrot.slane %v1587, 4
        %v1590 = vrot.slane %v1535, 5
        %v1591 = vsel %vm609, %v1589, %v1590
        %v1592 = vrot.slane %v1536, 5
        %v1593 = vrot.slane %v1592, 4
        %v1594 = vrot.slane %v1537, 5
        %v1595 = vsel %vm609, %v1593, %v1594
        %v1596 = vrot.slane %v1594, 4
        %v1597 = vrot.slane %v1538, 5
        %v1598 = vsel %vm609, %v1596, %v1597
        %v1599 = vrot.slane %v1539, 5
        %v1600 = vrot.slane %v1599, 4
        %v1601 = vrot.slane %v1540, 5
        %v1602 = vsel %vm609, %v1600, %v1601
        %v1603 = vrot.slane %v1601, 4
        %v1604 = vrot.slane %v1541, 5
        %v1605 = vsel %vm609, %v1603, %v1604
        %v1606 = vrot.slane %v1542, 5
        %v1607 = vrot.slane %v1606, 4
        %v1608 = vrot.slane %v1543, 5
        %v1609 = vsel %vm609, %v1607, %v1608
        %v1610 = vrot.slane %v1608, 4
        %v1611 = vrot.slane %v1544, 5
        %v1612 = vsel %vm609, %v1610, %v1611
        %v1613 = vrot.slane %v1545, 5
        %v1614 = vrot.slane %v1613, 4
        %v1615 = vrot.slane %v1546, 5
        %v1616 = vsel %vm609, %v1614, %v1615
        %v1617 = vrot.slane %v1615, 4
        %v1618 = vrot.slane %v1547, 5
        %v1619 = vsel %vm609, %v1617, %v1618
        %v1620 = vrot.slane %v1548, 5
        %v1621 = vrot.slane %v1620, 4
        %v1622 = vrot.slane %v1549, 5
        %v1623 = vsel %vm609, %v1621, %v1622
        %v1624 = vrot.slane %v1622, 4
        %v1625 = vrot.slane %v1550, 5
        %v1626 = vsel %vm609, %v1624, %v1625
        %v1627 = vrot.slane %v1551, 5
        %v1628 = vrot.slane %v1627, 4
        %v1629 = vrot.slane %v1552, 5
        %v1630 = vsel %vm609, %v1628, %v1629
        %v1631 = vrot.slane %v1629, 4
        %v1632 = vrot.slane %v1553, 5
        %v1633 = vsel %vm609, %v1631, %v1632
        %1650 = vst.msk [vmem:[#allocation2 + $0x10] sm:$0xf] %vm258, %v1581
        %1651 = vst.msk [vmem:[#allocation2 + $0x24] sm:$0xf] %vm258, %v1584
        %1652 = vst.msk [vmem:[#allocation2 + $0x38] sm:$0xf] %vm258, %v1588
        %1653 = vst.msk [vmem:[#allocation2 + $0x4c] sm:$0xf] %vm258, %v1591
        %1654 = vst.msk [vmem:[#allocation2 + $0x60] sm:$0xf] %vm258, %v1595
        %1655 = vst.msk [vmem:[#allocation2 + $0x74] sm:$0xf] %vm258, %v1598
        %1656 = vst.msk [vmem:[#allocation2 + $0x88] sm:$0xf] %vm258, %v1602
        %1657 = vst.msk [vmem:[#allocation2 + $0x9c] sm:$0xf] %vm258, %v1605
        %1658 = vst.msk [vmem:[#allocation2 + $0xb0] sm:$0xf] %vm258, %v1609
        %1659 = vst.msk [vmem:[#allocation2 + $0xc4] sm:$0xf] %vm258, %v1612
        %1660 = vst.msk [vmem:[#allocation2 + $0xd8] sm:$0xf] %vm258, %v1616
        %1661 = vst.msk [vmem:[#allocation2 + $0xec] sm:$0xf] %vm258, %v1619
        %1662 = vst.msk [vmem:[#allocation2 + $0x100] sm:$0xf] %vm258, %v1623
        %1663 = vst.msk [vmem:[#allocation2 + $0x114] sm:$0xf] %vm258, %v1626
        %1664 = vst.msk [vmem:[#allocation2 + $0x128] sm:$0xf] %vm258, %v1630
        %1665 = vst.msk [vmem:[#allocation2 + $0x13c] sm:$0xf] %vm258, %v1633
        %v1666 = vld [vmem:[#allocation2] sm:$0xff]
        %v1667 = vld [vmem:[#allocation2 + $0x8] sm:$0xff]
        %v1668 = vld [vmem:[#allocation2 + $0x10] sm:$0xf]
        %v1669 = vld [vmem:[#allocation2 + $0x14] sm:$0xff]
        %v1670 = vld [vmem:[#allocation2 + $0x1c] sm:$0xff]
        %v1671 = vld [vmem:[#allocation2 + $0x24] sm:$0xf]
        %v1672 = vld [vmem:[#allocation2 + $0x28] sm:$0xff]
        %v1673 = vld [vmem:[#allocation2 + $0x30] sm:$0xff]
        %v1674 = vld [vmem:[#allocation2 + $0x38] sm:$0xf]
        %v1675 = vld [vmem:[#allocation2 + $0x3c] sm:$0xff]
        %v1676 = vld [vmem:[#allocation2 + $0x44] sm:$0xff]
        %v1677 = vld [vmem:[#allocation2 + $0x4c] sm:$0xf]
        %v1678 = vld [vmem:[#allocation2 + $0x50] sm:$0xff]
        %v1679 = vld [vmem:[#allocation2 + $0x58] sm:$0xff]
        %v1680 = vld [vmem:[#allocation2 + $0x60] sm:$0xf]
        %v1681 = vld [vmem:[#allocation2 + $0x64] sm:$0xff]
        %v1682 = vld [vmem:[#allocation2 + $0x6c] sm:$0xff]
        %v1683 = vld [vmem:[#allocation2 + $0x74] sm:$0xf]
        %v1684 = vld [vmem:[#allocation2 + $0x78] sm:$0xff]
        %v1685 = vld [vmem:[#allocation2 + $0x80] sm:$0xff]
        %v1686 = vld [vmem:[#allocation2 + $0x88] sm:$0xf]
        %v1687 = vld [vmem:[#allocation2 + $0x8c] sm:$0xff]
        %v1688 = vld [vmem:[#allocation2 + $0x94] sm:$0xff]
        %v1689 = vld [vmem:[#allocation2 + $0x9c] sm:$0xf]
        %v1690 = vld [vmem:[#allocation2 + $0xa0] sm:$0xff]
        %v1691 = vld [vmem:[#allocation2 + $0xa8] sm:$0xff]
        %v1692 = vld [vmem:[#allocation2 + $0xb0] sm:$0xf]
        %v1693 = vld [vmem:[#allocation2 + $0xb4] sm:$0xff]
        %v1694 = vld [vmem:[#allocation2 + $0xbc] sm:$0xff]
        %v1695 = vld [vmem:[#allocation2 + $0xc4] sm:$0xf]
        %v1696 = vld [vmem:[#allocation2 + $0xc8] sm:$0xff]
        %v1697 = vld [vmem:[#allocation2 + $0xd0] sm:$0xff]
        %v1698 = vld [vmem:[#allocation2 + $0xd8] sm:$0xf]
        %v1699 = vld [vmem:[#allocation2 + $0xdc] sm:$0xff]
        %v1700 = vld [vmem:[#allocation2 + $0xe4] sm:$0xff]
        %v1701 = vld [vmem:[#allocation2 + $0xec] sm:$0xf]
        %v1702 = vld [vmem:[#allocation2 + $0xf0] sm:$0xff]
        %v1703 = vld [vmem:[#allocation2 + $0xf8] sm:$0xff]
        %v1704 = vld [vmem:[#allocation2 + $0x100] sm:$0xf]
        %v1705 = vld [vmem:[#allocation2 + $0x104] sm:$0xff]
        %v1706 = vld [vmem:[#allocation2 + $0x10c] sm:$0xff]
        %v1707 = vld [vmem:[#allocation2 + $0x114] sm:$0xf]
        %v1708 = vld [vmem:[#allocation2 + $0x118] sm:$0xff]
        %v1709 = vld [vmem:[#allocation2 + $0x120] sm:$0xff]
        %v1710 = vld [vmem:[#allocation2 + $0x128] sm:$0xf]
        %v1711 = vld [vmem:[#allocation2 + $0x12c] sm:$0xff]
        %v1712 = vld [vmem:[#allocation2 + $0x134] sm:$0xff]
        %v1713 = vld [vmem:[#allocation2 + $0x13c] sm:$0xf]
        %v1714 = vld [vmem:[%s1] sm:$0xff]
        %v1715 = vld [vmem:[%s1 + $0x8] sm:$0xff]
        %v1716 = vld [vmem:[%s1 + $0x10] sm:$0xff]
        %v1717 = vld [vmem:[%s1 + $0x18] sm:$0xff]
        %v1718 = vld [vmem:[%s1 + $0x20] sm:$0xff]
        %v1719 = vld [vmem:[%s1 + $0x28] sm:$0xff]
        %v1720 = vld [vmem:[%s1 + $0x30] sm:$0xff]
        %v1721 = vld [vmem:[%s1 + $0x38] sm:$0xff]
        %v1722 = vld [vmem:[%s1 + $0x40] sm:$0xff]
        %v1723 = vld [vmem:[%s1 + $0x48] sm:$0xff]
        %v1724 = vld [vmem:[%s1 + $0x50] sm:$0xff]
        %v1725 = vld [vmem:[%s1 + $0x58] sm:$0xff]
        %v1726 = vld [vmem:[%s1 + $0x60] sm:$0xff]
        %v1727 = vld [vmem:[%s1 + $0x68] sm:$0xff]
        %v1728 = vld [vmem:[%s1 + $0x70] sm:$0xff]
        %v1729 = vld [vmem:[%s1 + $0x78] sm:$0xff]
        %v1730 = vld [vmem:[%s1 + $0x80] sm:$0xff]
        %v1731 = vld [vmem:[%s1 + $0x88] sm:$0xff]
        %v1732 = vld [vmem:[%s1 + $0x90] sm:$0xff]
        %v1733 = vld [vmem:[%s1 + $0x98] sm:$0xff]
        %v1734 = vld [vmem:[%s1 + $0xa0] sm:$0xff]
        %v1735 = vld [vmem:[%s1 + $0xa8] sm:$0xff]
        %v1736 = vld [vmem:[%s1 + $0xb0] sm:$0xff]
        %v1737 = vld [vmem:[%s1 + $0xb8] sm:$0xff]
        %v1738 = vld [vmem:[%s1 + $0xc0] sm:$0xff]
        %v1739 = vld [vmem:[%s1 + $0xc8] sm:$0xff]
        %v1740 = vld [vmem:[%s1 + $0xd0] sm:$0xff]
        %v1741 = vld [vmem:[%s1 + $0xd8] sm:$0xff]
        %v1742 = vld [vmem:[%s1 + $0xe0] sm:$0xff]
        %v1743 = vld [vmem:[%s1 + $0xe8] sm:$0xff]
        %v1744 = vld [vmem:[%s1 + $0xf0] sm:$0xff]
        %v1745 = vld [vmem:[%s1 + $0xf8] sm:$0xff]
        %v1746 = vld [vmem:[%s1 + $0x100] sm:$0xff]
        %v1747 = vld [vmem:[%s1 + $0x108] sm:$0xff]
        %v1748 = vld [vmem:[%s1 + $0x110] sm:$0xff]
        %v1749 = vld [vmem:[%s1 + $0x118] sm:$0xff]
        %v1750 = vld [vmem:[%s1 + $0x120] sm:$0xff]
        %v1751 = vld [vmem:[%s1 + $0x128] sm:$0xff]
        %v1752 = vld [vmem:[%s1 + $0x130] sm:$0xff]
        %v1753 = vld [vmem:[%s1 + $0x138] sm:$0xff]
        %v1754 = vld [vmem:[%s1 + $0x140] sm:$0xff]
        %v1755 = vld [vmem:[%s1 + $0x148] sm:$0xff]
        %v1756 = vld [vmem:[%s1 + $0x150] sm:$0xff]
        %v1757 = vld [vmem:[%s1 + $0x158] sm:$0xff]
        %v1758 = vld [vmem:[%s1 + $0x160] sm:$0xff]
        %v1759 = vld [vmem:[%s1 + $0x168] sm:$0xff]
        %v1760 = vld [vmem:[%s1 + $0x170] sm:$0xff]
        %v1761 = vld [vmem:[%s1 + $0x178] sm:$0xff]
        %v1762 = vld [vmem:[%s1 + $0x180] sm:$0xff]
        %v1763 = vld [vmem:[%s1 + $0x188] sm:$0xff]
        %v1764 = vld [vmem:[%s1 + $0x190] sm:$0xff]
        %v1765 = vld [vmem:[%s1 + $0x198] sm:$0xff]
        %v1766 = vld [vmem:[%s1 + $0x1a0] sm:$0xff]
        %v1767 = vld [vmem:[%s1 + $0x1a8] sm:$0xff]
        %v1768 = vld [vmem:[%s1 + $0x1b0] sm:$0xff]
        %v1769 = vld [vmem:[%s1 + $0x1b8] sm:$0xff]
        %v1770 = vld [vmem:[%s1 + $0x1c0] sm:$0xff]
        %v1771 = vld [vmem:[%s1 + $0x1c8] sm:$0xff]
        %v1772 = vld [vmem:[%s1 + $0x1d0] sm:$0xff]
        %v1773 = vld [vmem:[%s1 + $0x1d8] sm:$0xff]
        %v1774 = vld [vmem:[%s1 + $0x1e0] sm:$0xff]
        %v1775 = vld [vmem:[%s1 + $0x1e8] sm:$0xff]
        %v1776 = vld [vmem:[%s1 + $0x1f0] sm:$0xff]
        %v1777 = vld [vmem:[%s1 + $0x1f8] sm:$0xff]
        %v1778 = vld [vmem:[%s1 + $0x200] sm:$0xff]
        %v1779 = vld [vmem:[%s1 + $0x208] sm:$0xff]
        %v1780 = vld [vmem:[%s1 + $0x210] sm:$0xff]
        %v1781 = vld [vmem:[%s1 + $0x218] sm:$0xff]
        %v1782 = vld [vmem:[%s1 + $0x220] sm:$0xff]
        %v1783 = vld [vmem:[%s1 + $0x228] sm:$0xff]
        %v1784 = vld [vmem:[%s1 + $0x230] sm:$0xff]
        %v1785 = vld [vmem:[%s1 + $0x238] sm:$0xff]
        %v1786 = vld [vmem:[#allocation4] sm:$0x3]
        %v1788 = vlaneseq
        %v1789 = vshrl.u32 %v1788, 7
        %v1790 = vsub.s32 0, %v1789
        %v1791 = vrot.slane %v1786, %v1790
        %v1792 = vlaneseq
        %v1793 = vshrl.u32 %v1792, 7
        %v1794 = vsub.s32 1, %v1793
        %v1795 = vrot.slane %v1786, %v1794
        %v1846 = vunpack.c.l.b16 %v1666
        %v1847 = vunpack.c.h.b16 %v1666
        %v1848 = vunpack.c.l.b16 %v1667
        %v1849 = vunpack.c.h.b16 %v1667
        %v1850 = vunpack.c.l.b16 %v1668
        %v1851 = vunpack.c.l.b16 %v1669
        %v1852 = vunpack.c.h.b16 %v1669
        %v1853 = vunpack.c.l.b16 %v1670
        %v1854 = vunpack.c.h.b16 %v1670
        %v1855 = vunpack.c.l.b16 %v1671
        %v1856 = vunpack.c.l.b16 %v1672
        %v1857 = vunpack.c.h.b16 %v1672
        %v1858 = vunpack.c.l.b16 %v1673
        %v1859 = vunpack.c.h.b16 %v1673
        %v1860 = vunpack.c.l.b16 %v1674
        %v1861 = vunpack.c.l.b16 %v1675
        %v1862 = vunpack.c.h.b16 %v1675
        %v1863 = vunpack.c.l.b16 %v1676
        %v1864 = vunpack.c.h.b16 %v1676
        %v1865 = vunpack.c.l.b16 %v1677
        %v1866 = vunpack.c.l.b16 %v1678
        %v1867 = vunpack.c.h.b16 %v1678
        %v1868 = vunpack.c.l.b16 %v1679
        %v1869 = vunpack.c.h.b16 %v1679
        %v1870 = vunpack.c.l.b16 %v1680
        %v1871 = vunpack.c.l.b16 %v1681
        %v1872 = vunpack.c.h.b16 %v1681
        %v1873 = vunpack.c.l.b16 %v1682
        %v1874 = vunpack.c.h.b16 %v1682
        %v1875 = vunpack.c.l.b16 %v1683
        %v1876 = vunpack.c.l.b16 %v1684
        %v1877 = vunpack.c.h.b16 %v1684
        %v1878 = vunpack.c.l.b16 %v1685
        %v1879 = vunpack.c.h.b16 %v1685
        %v1880 = vunpack.c.l.b16 %v1686
        %v1881 = vunpack.c.l.b16 %v1687
        %v1882 = vunpack.c.h.b16 %v1687
        %v1883 = vunpack.c.l.b16 %v1688
        %v1884 = vunpack.c.h.b16 %v1688
        %v1885 = vunpack.c.l.b16 %v1689
        %v1886 = vunpack.c.l.b16 %v1690
        %v1887 = vunpack.c.h.b16 %v1690
        %v1888 = vunpack.c.l.b16 %v1691
        %v1889 = vunpack.c.h.b16 %v1691
        %v1890 = vunpack.c.l.b16 %v1692
        %v1891 = vunpack.c.l.b16 %v1693
        %v1892 = vunpack.c.h.b16 %v1693
        %v1893 = vunpack.c.l.b16 %v1694
        %v1894 = vunpack.c.h.b16 %v1694
        %v1895 = vunpack.c.l.b16 %v1695
        %v1896 = vunpack.c.l.b16 %v1696
        %v1897 = vunpack.c.h.b16 %v1696
        %v1898 = vunpack.c.l.b16 %v1697
        %v1899 = vunpack.c.h.b16 %v1697
        %v1900 = vunpack.c.l.b16 %v1698
        %v1901 = vunpack.c.l.b16 %v1699
        %v1902 = vunpack.c.h.b16 %v1699
        %v1903 = vunpack.c.l.b16 %v1700
        %v1904 = vunpack.c.h.b16 %v1700
        %v1905 = vunpack.c.l.b16 %v1701
        %v1906 = vunpack.c.l.b16 %v1702
        %v1907 = vunpack.c.h.b16 %v1702
        %v1908 = vunpack.c.l.b16 %v1703
        %v1909 = vunpack.c.h.b16 %v1703
        %v1910 = vunpack.c.l.b16 %v1704
        %v1911 = vunpack.c.l.b16 %v1705
        %v1912 = vunpack.c.h.b16 %v1705
        %v1913 = vunpack.c.l.b16 %v1706
        %v1914 = vunpack.c.h.b16 %v1706
        %v1915 = vunpack.c.l.b16 %v1707
        %v1916 = vunpack.c.l.b16 %v1708
        %v1917 = vunpack.c.h.b16 %v1708
        %v1918 = vunpack.c.l.b16 %v1709
        %v1919 = vunpack.c.h.b16 %v1709
        %v1920 = vunpack.c.l.b16 %v1710
        %v1921 = vunpack.c.l.b16 %v1711
        %v1922 = vunpack.c.h.b16 %v1711
        %v1923 = vunpack.c.l.b16 %v1712
        %v1924 = vunpack.c.h.b16 %v1712
        %v1925 = vunpack.c.l.b16 %v1713
        %v1926 = vpack.c.b16 %v1851, %v1846
        %v1927 = vpack.c.b16 %v1852, %v1847
        %v1928 = vpack.c.b16 %v1853, %v1848
        %v1929 = vpack.c.b16 %v1854, %v1849
        %v1930 = vpack.c.b16 %v1855, %v1850
        %v1931 = vpack.c.b16 %v1861, %v1856
        %v1932 = vpack.c.b16 %v1862, %v1857
        %v1933 = vpack.c.b16 %v1863, %v1858
        %v1934 = vpack.c.b16 %v1864, %v1859
        %v1935 = vpack.c.b16 %v1865, %v1860
        %v1936 = vpack.c.b16 %v1871, %v1866
        %v1937 = vpack.c.b16 %v1872, %v1867
        %v1938 = vpack.c.b16 %v1873, %v1868
        %v1939 = vpack.c.b16 %v1874, %v1869
        %v1940 = vpack.c.b16 %v1875, %v1870
        %v1941 = vpack.c.b16 %v1881, %v1876
        %v1942 = vpack.c.b16 %v1882, %v1877
        %v1943 = vpack.c.b16 %v1883, %v1878
        %v1944 = vpack.c.b16 %v1884, %v1879
        %v1945 = vpack.c.b16 %v1885, %v1880
        %v1946 = vpack.c.b16 %v1891, %v1886
        %v1947 = vpack.c.b16 %v1892, %v1887
        %v1948 = vpack.c.b16 %v1893, %v1888
        %v1949 = vpack.c.b16 %v1894, %v1889
        %v1950 = vpack.c.b16 %v1895, %v1890
        %v1951 = vpack.c.b16 %v1901, %v1896
        %v1952 = vpack.c.b16 %v1902, %v1897
        %v1953 = vpack.c.b16 %v1903, %v1898
        %v1954 = vpack.c.b16 %v1904, %v1899
        %v1955 = vpack.c.b16 %v1905, %v1900
        %v1956 = vpack.c.b16 %v1911, %v1906
        %v1957 = vpack.c.b16 %v1912, %v1907
        %v1958 = vpack.c.b16 %v1913, %v1908
        %v1959 = vpack.c.b16 %v1914, %v1909
        %v1960 = vpack.c.b16 %v1915, %v1910
        %v1961 = vpack.c.b16 %v1921, %v1916
        %v1962 = vpack.c.b16 %v1922, %v1917
        %v1963 = vpack.c.b16 %v1923, %v1918
        %v1964 = vpack.c.b16 %v1924, %v1919
        %v1965 = vpack.c.b16 %v1925, %v1920
        %v2070 = vunpack.c.l.b16 %v1714
        %v2071 = vunpack.c.h.b16 %v1714
        %v2072 = vunpack.c.l.b16 %v1715
        %v2073 = vunpack.c.h.b16 %v1715
        %v2074 = vunpack.c.l.b16 %v1716
        %v2075 = vunpack.c.h.b16 %v1716
        %v2076 = vunpack.c.l.b16 %v1717
        %v2077 = vunpack.c.h.b16 %v1717
        %v2078 = vunpack.c.l.b16 %v1718
        %v2079 = vunpack.c.h.b16 %v1718
        %v2080 = vunpack.c.l.b16 %v1719
        %v2081 = vunpack.c.h.b16 %v1719
        %v2082 = vunpack.c.l.b16 %v1720
        %v2083 = vunpack.c.h.b16 %v1720
        %v2084 = vunpack.c.l.b16 %v1721
        %v2085 = vunpack.c.h.b16 %v1721
        %v2086 = vunpack.c.l.b16 %v1722
        %v2087 = vunpack.c.h.b16 %v1722
        %v2088 = vunpack.c.l.b16 %v1723
        %v2089 = vunpack.c.h.b16 %v1723
        %v2090 = vunpack.c.l.b16 %v1724
        %v2091 = vunpack.c.h.b16 %v1724
        %v2092 = vunpack.c.l.b16 %v1725
        %v2093 = vunpack.c.h.b16 %v1725
        %v2094 = vunpack.c.l.b16 %v1726
        %v2095 = vunpack.c.h.b16 %v1726
        %v2096 = vunpack.c.l.b16 %v1727
        %v2097 = vunpack.c.h.b16 %v1727
        %v2098 = vunpack.c.l.b16 %v1728
        %v2099 = vunpack.c.h.b16 %v1728
        %v2100 = vunpack.c.l.b16 %v1729
        %v2101 = vunpack.c.h.b16 %v1729
        %v2102 = vunpack.c.l.b16 %v1730
        %v2103 = vunpack.c.h.b16 %v1730
        %v2104 = vunpack.c.l.b16 %v1731
        %v2105 = vunpack.c.h.b16 %v1731
        %v2106 = vunpack.c.l.b16 %v1732
        %v2107 = vunpack.c.h.b16 %v1732
        %v2108 = vunpack.c.l.b16 %v1733
        %v2109 = vunpack.c.h.b16 %v1733
        %v2110 = vunpack.c.l.b16 %v1734
        %v2111 = vunpack.c.h.b16 %v1734
        %v2112 = vunpack.c.l.b16 %v1735
        %v2113 = vunpack.c.h.b16 %v1735
        %v2114 = vunpack.c.l.b16 %v1736
        %v2115 = vunpack.c.h.b16 %v1736
        %v2116 = vunpack.c.l.b16 %v1737
        %v2117 = vunpack.c.h.b16 %v1737
        %v2118 = vunpack.c.l.b16 %v1738
        %v2119 = vunpack.c.h.b16 %v1738
        %v2120 = vunpack.c.l.b16 %v1739
        %v2121 = vunpack.c.h.b16 %v1739
        %v2122 = vunpack.c.l.b16 %v1740
        %v2123 = vunpack.c.h.b16 %v1740
        %v2124 = vunpack.c.l.b16 %v1741
        %v2125 = vunpack.c.h.b16 %v1741
        %v2126 = vunpack.c.l.b16 %v1742
        %v2127 = vunpack.c.h.b16 %v1742
        %v2128 = vunpack.c.l.b16 %v1743
        %v2129 = vunpack.c.h.b16 %v1743
        %v2130 = vunpack.c.l.b16 %v1744
        %v2131 = vunpack.c.h.b16 %v1744
        %v2132 = vunpack.c.l.b16 %v1745
        %v2133 = vunpack.c.h.b16 %v1745
        %v2134 = vunpack.c.l.b16 %v1746
        %v2135 = vunpack.c.h.b16 %v1746
        %v2136 = vunpack.c.l.b16 %v1747
        %v2137 = vunpack.c.h.b16 %v1747
        %v2138 = vunpack.c.l.b16 %v1748
        %v2139 = vunpack.c.h.b16 %v1748
        %v2140 = vunpack.c.l.b16 %v1749
        %v2141 = vunpack.c.h.b16 %v1749
        %v2142 = vunpack.c.l.b16 %v1750
        %v2143 = vunpack.c.h.b16 %v1750
        %v2144 = vunpack.c.l.b16 %v1751
        %v2145 = vunpack.c.h.b16 %v1751
        %v2146 = vunpack.c.l.b16 %v1752
        %v2147 = vunpack.c.h.b16 %v1752
        %v2148 = vunpack.c.l.b16 %v1753
        %v2149 = vunpack.c.h.b16 %v1753
        %v2150 = vunpack.c.l.b16 %v1754
        %v2151 = vunpack.c.h.b16 %v1754
        %v2152 = vunpack.c.l.b16 %v1755
        %v2153 = vunpack.c.h.b16 %v1755
        %v2154 = vunpack.c.l.b16 %v1756
        %v2155 = vunpack.c.h.b16 %v1756
        %v2156 = vunpack.c.l.b16 %v1757
        %v2157 = vunpack.c.h.b16 %v1757
        %v2158 = vunpack.c.l.b16 %v1758
        %v2159 = vunpack.c.h.b16 %v1758
        %v2160 = vunpack.c.l.b16 %v1759
        %v2161 = vunpack.c.h.b16 %v1759
        %v2162 = vunpack.c.l.b16 %v1760
        %v2163 = vunpack.c.h.b16 %v1760
        %v2164 = vunpack.c.l.b16 %v1761
        %v2165 = vunpack.c.h.b16 %v1761
        %v2166 = vunpack.c.l.b16 %v1762
        %v2167 = vunpack.c.h.b16 %v1762
        %v2168 = vunpack.c.l.b16 %v1763
        %v2169 = vunpack.c.h.b16 %v1763
        %v2170 = vunpack.c.l.b16 %v1764
        %v2171 = vunpack.c.h.b16 %v1764
        %v2172 = vunpack.c.l.b16 %v1765
        %v2173 = vunpack.c.h.b16 %v1765
        %v2174 = vunpack.c.l.b16 %v1766
        %v2175 = vunpack.c.h.b16 %v1766
        %v2176 = vunpack.c.l.b16 %v1767
        %v2177 = vunpack.c.h.b16 %v1767
        %v2178 = vunpack.c.l.b16 %v1768
        %v2179 = vunpack.c.h.b16 %v1768
        %v2180 = vunpack.c.l.b16 %v1769
        %v2181 = vunpack.c.h.b16 %v1769
        %v2182 = vunpack.c.l.b16 %v1770
        %v2183 = vunpack.c.h.b16 %v1770
        %v2184 = vunpack.c.l.b16 %v1771
        %v2185 = vunpack.c.h.b16 %v1771
        %v2186 = vunpack.c.l.b16 %v1772
        %v2187 = vunpack.c.h.b16 %v1772
        %v2188 = vunpack.c.l.b16 %v1773
        %v2189 = vunpack.c.h.b16 %v1773
        %v2190 = vunpack.c.l.b16 %v1774
        %v2191 = vunpack.c.h.b16 %v1774
        %v2192 = vunpack.c.l.b16 %v1775
        %v2193 = vunpack.c.h.b16 %v1775
        %v2194 = vunpack.c.l.b16 %v1776
        %v2195 = vunpack.c.h.b16 %v1776
        %v2196 = vunpack.c.l.b16 %v1777
        %v2197 = vunpack.c.h.b16 %v1777
        %v2198 = vunpack.c.l.b16 %v1778
        %v2199 = vunpack.c.h.b16 %v1778
        %v2200 = vunpack.c.l.b16 %v1779
        %v2201 = vunpack.c.h.b16 %v1779
        %v2202 = vunpack.c.l.b16 %v1780
        %v2203 = vunpack.c.h.b16 %v1780
        %v2204 = vunpack.c.l.b16 %v1781
        %v2205 = vunpack.c.h.b16 %v1781
        %v2206 = vunpack.c.l.b16 %v1782
        %v2207 = vunpack.c.h.b16 %v1782
        %v2208 = vunpack.c.l.b16 %v1783
        %v2209 = vunpack.c.h.b16 %v1783
        %v2210 = vunpack.c.l.b16 %v1784
        %v2211 = vunpack.c.h.b16 %v1784
        %v2212 = vunpack.c.l.b16 %v1785
        %v2213 = vunpack.c.h.b16 %v1785
        %v2214 = vpack.c.b16 %v2072, %v2070
        %v2215 = vpack.c.b16 %v2073, %v2071
        %v2216 = vpack.c.b16 %v2076, %v2074
        %v2217 = vpack.c.b16 %v2077, %v2075
        %v2218 = vpack.c.b16 %v2080, %v2078
        %v2219 = vpack.c.b16 %v2081, %v2079
        %v2220 = vpack.c.b16 %v2084, %v2082
        %v2221 = vpack.c.b16 %v2085, %v2083
        %v2222 = vpack.c.b16 %v2088, %v2086
        %v2223 = vpack.c.b16 %v2089, %v2087
        %v2224 = vpack.c.b16 %v2092, %v2090
        %v2225 = vpack.c.b16 %v2093, %v2091
        %v2226 = vpack.c.b16 %v2096, %v2094
        %v2227 = vpack.c.b16 %v2097, %v2095
        %v2228 = vpack.c.b16 %v2100, %v2098
        %v2229 = vpack.c.b16 %v2101, %v2099
        %v2230 = vpack.c.b16 %v2104, %v2102
        %v2231 = vpack.c.b16 %v2105, %v2103
        %v2232 = vpack.c.b16 %v2108, %v2106
        %v2233 = vpack.c.b16 %v2109, %v2107
        %v2234 = vpack.c.b16 %v2112, %v2110
        %v2235 = vpack.c.b16 %v2113, %v2111
        %v2236 = vpack.c.b16 %v2116, %v2114
        %v2237 = vpack.c.b16 %v2117, %v2115
        %v2238 = vpack.c.b16 %v2120, %v2118
        %v2239 = vpack.c.b16 %v2121, %v2119
        %v2240 = vpack.c.b16 %v2124, %v2122
        %v2241 = vpack.c.b16 %v2125, %v2123
        %v2242 = vpack.c.b16 %v2128, %v2126
        %v2243 = vpack.c.b16 %v2129, %v2127
        %v2244 = vpack.c.b16 %v2132, %v2130
        %v2245 = vpack.c.b16 %v2133, %v2131
        %v2246 = vpack.c.b16 %v2136, %v2134
        %v2247 = vpack.c.b16 %v2137, %v2135
        %v2248 = vpack.c.b16 %v2140, %v2138
        %v2249 = vpack.c.b16 %v2141, %v2139
        %v2250 = vpack.c.b16 %v2144, %v2142
        %v2251 = vpack.c.b16 %v2145, %v2143
        %v2252 = vpack.c.b16 %v2148, %v2146
        %v2253 = vpack.c.b16 %v2149, %v2147
        %v2254 = vpack.c.b16 %v2152, %v2150
        %v2255 = vpack.c.b16 %v2153, %v2151
        %v2256 = vpack.c.b16 %v2156, %v2154
        %v2257 = vpack.c.b16 %v2157, %v2155
        %v2258 = vpack.c.b16 %v2160, %v2158
        %v2259 = vpack.c.b16 %v2161, %v2159
        %v2260 = vpack.c.b16 %v2164, %v2162
        %v2261 = vpack.c.b16 %v2165, %v2163
        %v2262 = vpack.c.b16 %v2168, %v2166
        %v2263 = vpack.c.b16 %v2169, %v2167
        %v2264 = vpack.c.b16 %v2172, %v2170
        %v2265 = vpack.c.b16 %v2173, %v2171
        %v2266 = vpack.c.b16 %v2176, %v2174
        %v2267 = vpack.c.b16 %v2177, %v2175
        %v2268 = vpack.c.b16 %v2180, %v2178
        %v2269 = vpack.c.b16 %v2181, %v2179
        %v2270 = vpack.c.b16 %v2184, %v2182
        %v2271 = vpack.c.b16 %v2185, %v2183
        %v2272 = vpack.c.b16 %v2188, %v2186
        %v2273 = vpack.c.b16 %v2189, %v2187
        %v2274 = vpack.c.b16 %v2192, %v2190
        %v2275 = vpack.c.b16 %v2193, %v2191
        %v2276 = vpack.c.b16 %v2196, %v2194
        %v2277 = vpack.c.b16 %v2197, %v2195
        %v2278 = vpack.c.b16 %v2200, %v2198
        %v2279 = vpack.c.b16 %v2201, %v2199
        %v2280 = vpack.c.b16 %v2204, %v2202
        %v2281 = vpack.c.b16 %v2205, %v2203
        %v2282 = vpack.c.b16 %v2208, %v2206
        %v2283 = vpack.c.b16 %v2209, %v2207
        %v2284 = vpack.c.b16 %v2212, %v2210
        %v2285 = vpack.c.b16 %v2213, %v2211
        %vm2358 = vcmask 523264
        %v2360 = vsel %vm2358, %v1930, 0
        %v2363 = vsel %vm2358, %v1935, 0
        %v2366 = vsel %vm2358, %v1940, 0
        %v2369 = vsel %vm2358, %v1945, 0
        %v2372 = vsel %vm2358, %v1950, 0
        %v2375 = vsel %vm2358, %v1955, 0
        %v2378 = vsel %vm2358, %v1960, 0
        %v2381 = vsel %vm2358, %v1965, 0
        %2383 = vmatprep.subr.bf16.mxu0 %v2229
        %2384 = vmatpush1.bf16.msra.mxu0 %v2228
        %2385 = vmatprep.subr.bf16.mxu0 %v2227
        %2386 = vmatpush1.bf16.msra.mxu0 %v2226
        %2387 = vmatprep.subr.bf16.mxu0 %v2225
        %2388 = vmatpush1.bf16.msra.mxu0 %v2224
        %2389 = vmatprep.subr.bf16.mxu0 %v2223
        %2390 = vmatpush1.bf16.msra.mxu0 %v2222
        %2391 = vmatprep.subr.bf16.mxu0 %v2221
        %2392 = vmatpush1.bf16.msra.mxu0 %v2220
        %2393 = vmatprep.subr.bf16.mxu0 %v2219
        %2394 = vmatpush1.bf16.msra.mxu0 %v2218
        %2395 = vmatprep.subr.bf16.mxu0 %v2217
        %2396 = vmatpush1.bf16.msra.mxu0 %v2216
        %2397 = vmatprep.subr.bf16.mxu0 %v2215
        %2398 = vmatpush1.bf16.msra.mxu0 %v2214
        %2399 = vmatprep.subr.bf16.mxu0 %v2245
        %2400 = vmatpush2.bf16.msra.mxu0 %v2244
        %2401 = vmatprep.subr.bf16.mxu0 %v2243
        %2402 = vmatpush2.bf16.msra.mxu0 %v2242
        %2403 = vmatprep.subr.bf16.mxu0 %v2241
        %2404 = vmatpush2.bf16.msra.mxu0 %v2240
        %2405 = vmatprep.subr.bf16.mxu0 %v2239
        %2406 = vmatpush2.bf16.msra.mxu0 %v2238
        %2407 = vmatprep.subr.bf16.mxu0 %v2237
        %2408 = vmatpush2.bf16.msra.mxu0 %v2236
        %2409 = vmatprep.subr.bf16.mxu0 %v2235
        %2410 = vmatpush2.bf16.msra.mxu0 %v2234
        %2411 = vmatprep.subr.bf16.mxu0 %v2233
        %2412 = vmatpush2.bf16.msra.mxu0 %v2232
        %2413 = vmatprep.subr.bf16.mxu0 %v2231
        %2414 = vmatpush2.bf16.msra.mxu0 %v2230
        %2415 = vmatprep.mubr.bf16.mxu0 %v1927
        %2416 = vmatmul.mubr.bf16.gmra.mxu0 %v1926
        %v2417 = vpop.f32.mrf.mxu0
        %v2418 = vadd.f32 %v1791, %v2417
        %v2419 = vpop.f32.mrf.mxu0
        %v2420 = vadd.f32 %v1795, %v2419
        %v2421 = vpop.f32.mrf.mxu0
        %v2422 = vadd.f32 %v1791, %v2421
        %v2423 = vpop.f32.mrf.mxu0
        %v2424 = vadd.f32 %v1795, %v2423
        %2425 = vmatprep.mubr.bf16.mxu0 %v1932
        %2426 = vmatmul.mubr.bf16.gmra.mxu0 %v1931
        %v2427 = vpop.f32.mrf.mxu0
        %v2428 = vadd.f32 %v1791, %v2427
        %v2429 = vpop.f32.mrf.mxu0
        %v2430 = vadd.f32 %v1795, %v2429
        %v2431 = vpop.f32.mrf.mxu0
        %v2432 = vadd.f32 %v1791, %v2431
        %v2433 = vpop.f32.mrf.mxu0
        %v2434 = vadd.f32 %v1795, %v2433
        %2435 = vmatprep.mubr.bf16.mxu0 %v1937
        %2436 = vmatmul.mubr.bf16.gmra.mxu0 %v1936
        %v2437 = vpop.f32.mrf.mxu0
        %v2438 = vadd.f32 %v1791, %v2437
        %v2439 = vpop.f32.mrf.mxu0
        %v2440 = vadd.f32 %v1795, %v2439
        %v2441 = vpop.f32.mrf.mxu0
        %v2442 = vadd.f32 %v1791, %v2441
        %v2443 = vpop.f32.mrf.mxu0
        %v2444 = vadd.f32 %v1795, %v2443
        %2445 = vmatprep.mubr.bf16.mxu0 %v1942
        %2446 = vmatmul.mubr.bf16.gmra.mxu0 %v1941
        %v2447 = vpop.f32.mrf.mxu0
        %v2448 = vadd.f32 %v1791, %v2447
        %v2449 = vpop.f32.mrf.mxu0
        %v2450 = vadd.f32 %v1795, %v2449
        %v2451 = vpop.f32.mrf.mxu0
        %v2452 = vadd.f32 %v1791, %v2451
        %v2453 = vpop.f32.mrf.mxu0
        %v2454 = vadd.f32 %v1795, %v2453
        %2455 = vmatprep.mubr.bf16.mxu0 %v1947
        %2456 = vmatmul.mubr.bf16.gmra.mxu0 %v1946
        %v2457 = vpop.f32.mrf.mxu0
        %v2458 = vadd.f32 %v1791, %v2457
        %v2459 = vpop.f32.mrf.mxu0
        %v2460 = vadd.f32 %v1795, %v2459
        %v2461 = vpop.f32.mrf.mxu0
        %v2462 = vadd.f32 %v1791, %v2461
        %v2463 = vpop.f32.mrf.mxu0
        %v2464 = vadd.f32 %v1795, %v2463
        %2465 = vmatprep.mubr.bf16.mxu0 %v1952
        %2466 = vmatmul.mubr.bf16.gmra.mxu0 %v1951
        %v2467 = vpop.f32.mrf.mxu0
        %v2468 = vadd.f32 %v1791, %v2467
        %v2469 = vpop.f32.mrf.mxu0
        %v2470 = vadd.f32 %v1795, %v2469
        %v2471 = vpop.f32.mrf.mxu0
        %v2472 = vadd.f32 %v1791, %v2471
        %v2473 = vpop.f32.mrf.mxu0
        %v2474 = vadd.f32 %v1795, %v2473
        %2475 = vmatprep.mubr.bf16.mxu0 %v1957
        %2476 = vmatmul.mubr.bf16.gmra.mxu0 %v1956
        %v2477 = vpop.f32.mrf.mxu0
        %v2478 = vadd.f32 %v1791, %v2477
        %v2479 = vpop.f32.mrf.mxu0
        %v2480 = vadd.f32 %v1795, %v2479
        %v2481 = vpop.f32.mrf.mxu0
        %v2482 = vadd.f32 %v1791, %v2481
        %v2483 = vpop.f32.mrf.mxu0
        %v2484 = vadd.f32 %v1795, %v2483
        %2485 = vmatprep.mubr.bf16.mxu0 %v1962
        %2486 = vmatmul.mubr.bf16.gmra.mxu0 %v1961
        %v2487 = vpop.f32.mrf.mxu0
        %v2488 = vadd.f32 %v1791, %v2487
        %v2489 = vpop.f32.mrf.mxu0
        %v2490 = vadd.f32 %v1795, %v2489
        %v2491 = vpop.f32.mrf.mxu0
        %v2492 = vadd.f32 %v1791, %v2491
        %v2493 = vpop.f32.mrf.mxu0
        %v2494 = vadd.f32 %v1795, %v2493
        %2495 = vdwg.mxu0
        %2496 = vmatprep.subr.bf16.mxu0 %v2261
        %2497 = vmatpush1.bf16.msra.mxu0 %v2260
        %2498 = vmatprep.subr.bf16.mxu0 %v2259
        %2499 = vmatpush1.bf16.msra.mxu0 %v2258
        %2500 = vmatprep.subr.bf16.mxu0 %v2257
        %2501 = vmatpush1.bf16.msra.mxu0 %v2256
        %2502 = vmatprep.subr.bf16.mxu0 %v2255
        %2503 = vmatpush1.bf16.msra.mxu0 %v2254
        %2504 = vmatprep.subr.bf16.mxu0 %v2253
        %2505 = vmatpush1.bf16.msra.mxu0 %v2252
        %2506 = vmatprep.subr.bf16.mxu0 %v2251
        %2507 = vmatpush1.bf16.msra.mxu0 %v2250
        %2508 = vmatprep.subr.bf16.mxu0 %v2249
        %2509 = vmatpush1.bf16.msra.mxu0 %v2248
        %2510 = vmatprep.subr.bf16.mxu0 %v2247
        %2511 = vmatpush1.bf16.msra.mxu0 %v2246
        %2512 = vmatprep.subr.bf16.mxu0 %v2277
        %2513 = vmatpush2.bf16.msra.mxu0 %v2276
        %2514 = vmatprep.subr.bf16.mxu0 %v2275
        %2515 = vmatpush2.bf16.msra.mxu0 %v2274
        %2516 = vmatprep.subr.bf16.mxu0 %v2273
        %2517 = vmatpush2.bf16.msra.mxu0 %v2272
        %2518 = vmatprep.subr.bf16.mxu0 %v2271
        %2519 = vmatpush2.bf16.msra.mxu0 %v2270
        %2520 = vmatprep.subr.bf16.mxu0 %v2269
        %2521 = vmatpush2.bf16.msra.mxu0 %v2268
        %2522 = vmatprep.subr.bf16.mxu0 %v2267
        %2523 = vmatpush2.bf16.msra.mxu0 %v2266
        %2524 = vmatprep.subr.bf16.mxu0 %v2265
        %2525 = vmatpush2.bf16.msra.mxu0 %v2264
        %2526 = vmatprep.subr.bf16.mxu0 %v2263
        %2527 = vmatpush2.bf16.msra.mxu0 %v2262
        %2528 = vmatprep.mubr.bf16.mxu0 %v1929
        %2529 = vmatmul.mubr.bf16.gmra.mxu0 %v1928
        %v2530 = vpop.f32.mrf.mxu0
        %v2531 = vadd.f32 %v2418, %v2530
        %v2532 = vpop.f32.mrf.mxu0
        %v2533 = vadd.f32 %v2420, %v2532
        %v2534 = vpop.f32.mrf.mxu0
        %v2535 = vadd.f32 %v2422, %v2534
        %v2536 = vpop.f32.mrf.mxu0
        %v2537 = vadd.f32 %v2424, %v2536
        %2538 = vmatprep.mubr.bf16.mxu0 %v1934
        %2539 = vmatmul.mubr.bf16.gmra.mxu0 %v1933
        %v2540 = vpop.f32.mrf.mxu0
        %v2541 = vadd.f32 %v2428, %v2540
        %v2542 = vpop.f32.mrf.mxu0
        %v2543 = vadd.f32 %v2430, %v2542
        %v2544 = vpop.f32.mrf.mxu0
        %v2545 = vadd.f32 %v2432, %v2544
        %v2546 = vpop.f32.mrf.mxu0
        %v2547 = vadd.f32 %v2434, %v2546
        %2548 = vmatprep.mubr.bf16.mxu0 %v1939
        %2549 = vmatmul.mubr.bf16.gmra.mxu0 %v1938
        %v2550 = vpop.f32.mrf.mxu0
        %v2551 = vadd.f32 %v2438, %v2550
        %v2552 = vpop.f32.mrf.mxu0
        %v2553 = vadd.f32 %v2440, %v2552
        %v2554 = vpop.f32.mrf.mxu0
        %v2555 = vadd.f32 %v2442, %v2554
        %v2556 = vpop.f32.mrf.mxu0
        %v2557 = vadd.f32 %v2444, %v2556
        %2558 = vmatprep.mubr.bf16.mxu0 %v1944
        %2559 = vmatmul.mubr.bf16.gmra.mxu0 %v1943
        %v2560 = vpop.f32.mrf.mxu0
        %v2561 = vadd.f32 %v2448, %v2560
        %v2562 = vpop.f32.mrf.mxu0
        %v2563 = vadd.f32 %v2450, %v2562
        %v2564 = vpop.f32.mrf.mxu0
        %v2565 = vadd.f32 %v2452, %v2564
        %v2566 = vpop.f32.mrf.mxu0
        %v2567 = vadd.f32 %v2454, %v2566
        %2568 = vmatprep.mubr.bf16.mxu0 %v1949
        %2569 = vmatmul.mubr.bf16.gmra.mxu0 %v1948
        %v2570 = vpop.f32.mrf.mxu0
        %v2571 = vadd.f32 %v2458, %v2570
        %v2572 = vpop.f32.mrf.mxu0
        %v2573 = vadd.f32 %v2460, %v2572
        %v2574 = vpop.f32.mrf.mxu0
        %v2575 = vadd.f32 %v2462, %v2574
        %v2576 = vpop.f32.mrf.mxu0
        %v2577 = vadd.f32 %v2464, %v2576
        %2578 = vmatprep.mubr.bf16.mxu0 %v1954
        %2579 = vmatmul.mubr.bf16.gmra.mxu0 %v1953
        %v2580 = vpop.f32.mrf.mxu0
        %v2581 = vadd.f32 %v2468, %v2580
        %v2582 = vpop.f32.mrf.mxu0
        %v2583 = vadd.f32 %v2470, %v2582
        %v2584 = vpop.f32.mrf.mxu0
        %v2585 = vadd.f32 %v2472, %v2584
        %v2586 = vpop.f32.mrf.mxu0
        %v2587 = vadd.f32 %v2474, %v2586
        %2588 = vmatprep.mubr.bf16.mxu0 %v1959
        %2589 = vmatmul.mubr.bf16.gmra.mxu0 %v1958
        %v2590 = vpop.f32.mrf.mxu0
        %v2591 = vadd.f32 %v2478, %v2590
        %v2592 = vpop.f32.mrf.mxu0
        %v2593 = vadd.f32 %v2480, %v2592
        %v2594 = vpop.f32.mrf.mxu0
        %v2595 = vadd.f32 %v2482, %v2594
        %v2596 = vpop.f32.mrf.mxu0
        %v2597 = vadd.f32 %v2484, %v2596
        %2598 = vmatprep.mubr.bf16.mxu0 %v1964
        %2599 = vmatmul.mubr.bf16.gmra.mxu0 %v1963
        %v2600 = vpop.f32.mrf.mxu0
        %v2601 = vadd.f32 %v2488, %v2600
        %v2602 = vpop.f32.mrf.mxu0
        %v2603 = vadd.f32 %v2490, %v2602
        %v2604 = vpop.f32.mrf.mxu0
        %v2605 = vadd.f32 %v2492, %v2604
        %v2606 = vpop.f32.mrf.mxu0
        %v2607 = vadd.f32 %v2494, %v2606
        %2608 = vdwg.mxu0
        %2609 = vmatprep.subr.bf16.mxu0 0
        %2610 = vmatpush1.bf16.msra.mxu0 0
        %2611 = vmatprep.subr.bf16.mxu0 0
        %2612 = vmatpush1.bf16.msra.mxu0 0
        %2613 = vmatprep.subr.bf16.mxu0 0
        %2614 = vmatpush1.bf16.msra.mxu0 0
        %2615 = vmatprep.subr.bf16.mxu0 0
        %2616 = vmatpush1.bf16.msra.mxu0 0
        %2617 = vmatprep.subr.bf16.mxu0 %v2285
        %2618 = vmatpush1.bf16.msra.mxu0 %v2284
        %2619 = vmatprep.subr.bf16.mxu0 %v2283
        %2620 = vmatpush1.bf16.msra.mxu0 %v2282
        %2621 = vmatprep.subr.bf16.mxu0 %v2281
        %2622 = vmatpush1.bf16.msra.mxu0 %v2280
        %2623 = vmatprep.subr.bf16.mxu0 %v2279
        %2624 = vmatpush1.bf16.msra.mxu0 %v2278
        %2625 = vmatprep.subr.bf16.mxu0 0
        %2626 = vmatpush2.bf16.msra.mxu0 0
        %2627 = vmatprep.subr.bf16.mxu0 0
        %2628 = vmatpush2.bf16.msra.mxu0 0
        %2629 = vmatprep.subr.bf16.mxu0 0
        %2630 = vmatpush2.bf16.msra.mxu0 0
        %2631 = vmatprep.subr.bf16.mxu0 0
        %2632 = vmatpush2.bf16.msra.mxu0 0
        %2633 = vmatprep.subr.bf16.mxu0 0
        %2634 = vmatpush2.bf16.msra.mxu0 0
        %2635 = vmatprep.subr.bf16.mxu0 0
        %2636 = vmatpush2.bf16.msra.mxu0 0
        %2637 = vmatprep.subr.bf16.mxu0 0
        %2638 = vmatpush2.bf16.msra.mxu0 0
        %2639 = vmatprep.subr.bf16.mxu0 0
        %2640 = vmatpush2.bf16.msra.mxu0 0
        %2641 = vmatprep.mubr.bf16.mxu0 0
        %2642 = vmatmul.mubr.bf16.gmra.mxu0 %v2360
        %v2643 = vpop.f32.mrf.mxu0
        %v2644 = vadd.f32 %v2531, %v2643
        %v2645 = vpop.f32.mrf.mxu0
        %v2646 = vadd.f32 %v2533, %v2645
        %v2647 = vpop.f32.mrf.mxu0
        %v2648 = vadd.f32 %v2535, %v2647
        %v2649 = vpop.f32.mrf.mxu0
        %v2650 = vadd.f32 %v2537, %v2649
        %2651 = vmatprep.mubr.bf16.mxu0 0
        %2652 = vmatmul.mubr.bf16.gmra.mxu0 %v2363
        %v2653 = vpop.f32.mrf.mxu0
        %v2654 = vadd.f32 %v2541, %v2653
        %v2655 = vpop.f32.mrf.mxu0
        %v2656 = vadd.f32 %v2543, %v2655
        %v2657 = vpop.f32.mrf.mxu0
        %v2658 = vadd.f32 %v2545, %v2657
        %v2659 = vpop.f32.mrf.mxu0
        %v2660 = vadd.f32 %v2547, %v2659
        %2661 = vmatprep.mubr.bf16.mxu0 0
        %2662 = vmatmul.mubr.bf16.gmra.mxu0 %v2366
        %v2663 = vpop.f32.mrf.mxu0
        %v2664 = vadd.f32 %v2551, %v2663
        %v2665 = vpop.f32.mrf.mxu0
        %v2666 = vadd.f32 %v2553, %v2665
        %v2667 = vpop.f32.mrf.mxu0
        %v2668 = vadd.f32 %v2555, %v2667
        %v2669 = vpop.f32.mrf.mxu0
        %v2670 = vadd.f32 %v2557, %v2669
        %2671 = vmatprep.mubr.bf16.mxu0 0
        %2672 = vmatmul.mubr.bf16.gmra.mxu0 %v2369
        %v2673 = vpop.f32.mrf.mxu0
        %v2674 = vadd.f32 %v2561, %v2673
        %v2675 = vpop.f32.mrf.mxu0
        %v2676 = vadd.f32 %v2563, %v2675
        %v2677 = vpop.f32.mrf.mxu0
        %v2678 = vadd.f32 %v2565, %v2677
        %v2679 = vpop.f32.mrf.mxu0
        %v2680 = vadd.f32 %v2567, %v2679
        %2681 = vmatprep.mubr.bf16.mxu0 0
        %2682 = vmatmul.mubr.bf16.gmra.mxu0 %v2372
        %v2683 = vpop.f32.mrf.mxu0
        %v2684 = vadd.f32 %v2571, %v2683
        %v2685 = vpop.f32.mrf.mxu0
        %v2686 = vadd.f32 %v2573, %v2685
        %v2687 = vpop.f32.mrf.mxu0
        %v2688 = vadd.f32 %v2575, %v2687
        %v2689 = vpop.f32.mrf.mxu0
        %v2690 = vadd.f32 %v2577, %v2689
        %2691 = vmatprep.mubr.bf16.mxu0 0
        %2692 = vmatmul.mubr.bf16.gmra.mxu0 %v2375
        %v2693 = vpop.f32.mrf.mxu0
        %v2694 = vadd.f32 %v2581, %v2693
        %v2695 = vpop.f32.mrf.mxu0
        %v2696 = vadd.f32 %v2583, %v2695
        %v2697 = vpop.f32.mrf.mxu0
        %v2698 = vadd.f32 %v2585, %v2697
        %v2699 = vpop.f32.mrf.mxu0
        %v2700 = vadd.f32 %v2587, %v2699
        %2701 = vmatprep.mubr.bf16.mxu0 0
        %2702 = vmatmul.mubr.bf16.gmra.mxu0 %v2378
        %v2703 = vpop.f32.mrf.mxu0
        %v2704 = vadd.f32 %v2591, %v2703
        %v2705 = vpop.f32.mrf.mxu0
        %v2706 = vadd.f32 %v2593, %v2705
        %v2707 = vpop.f32.mrf.mxu0
        %v2708 = vadd.f32 %v2595, %v2707
        %v2709 = vpop.f32.mrf.mxu0
        %v2710 = vadd.f32 %v2597, %v2709
        %2711 = vmatprep.mubr.bf16.mxu0 0
        %2712 = vmatmul.mubr.bf16.gmra.mxu0 %v2381
        %v2713 = vpop.f32.mrf.mxu0
        %v2714 = vadd.f32 %v2601, %v2713
        %v2715 = vpop.f32.mrf.mxu0
        %v2716 = vadd.f32 %v2603, %v2715
        %v2717 = vpop.f32.mrf.mxu0
        %v2718 = vadd.f32 %v2605, %v2717
        %v2719 = vpop.f32.mrf.mxu0
        %v2720 = vadd.f32 %v2607, %v2719
        %2721 = vdwg.mxu0
        %s2722 = sld [smem:[#allocation3]]
        %vm2723 = vcmp.ge.f32.partialorder %v2644, 0.0
        %vm2724 = vcmp.ge.f32.partialorder %v2646, 0.0
        %vm2725 = vcmp.ge.f32.partialorder %v2648, 0.0
        %vm2726 = vcmp.ge.f32.partialorder %v2650, 0.0
        %vm2727 = vcmp.ge.f32.partialorder %v2654, 0.0
        %vm2728 = vcmp.ge.f32.partialorder %v2656, 0.0
        %vm2729 = vcmp.ge.f32.partialorder %v2658, 0.0
        %vm2730 = vcmp.ge.f32.partialorder %v2660, 0.0
        %vm2731 = vcmp.ge.f32.partialorder %v2664, 0.0
        %vm2732 = vcmp.ge.f32.partialorder %v2666, 0.0
        %vm2733 = vcmp.ge.f32.partialorder %v2668, 0.0
        %vm2734 = vcmp.ge.f32.partialorder %v2670, 0.0
        %vm2735 = vcmp.ge.f32.partialorder %v2674, 0.0
        %vm2736 = vcmp.ge.f32.partialorder %v2676, 0.0
        %vm2737 = vcmp.ge.f32.partialorder %v2678, 0.0
        %vm2738 = vcmp.ge.f32.partialorder %v2680, 0.0
        %vm2739 = vcmp.ge.f32.partialorder %v2684, 0.0
        %vm2740 = vcmp.ge.f32.partialorder %v2686, 0.0
        %vm2741 = vcmp.ge.f32.partialorder %v2688, 0.0
        %vm2742 = vcmp.ge.f32.partialorder %v2690, 0.0
        %vm2743 = vcmp.ge.f32.partialorder %v2694, 0.0
        %vm2744 = vcmp.ge.f32.partialorder %v2696, 0.0
        %vm2745 = vcmp.ge.f32.partialorder %v2698, 0.0
        %vm2746 = vcmp.ge.f32.partialorder %v2700, 0.0
        %vm2747 = vcmp.ge.f32.partialorder %v2704, 0.0
        %vm2748 = vcmp.ge.f32.partialorder %v2706, 0.0
        %vm2749 = vcmp.ge.f32.partialorder %v2708, 0.0
        %vm2750 = vcmp.ge.f32.partialorder %v2710, 0.0
        %vm2751 = vcmp.ge.f32.partialorder %v2714, 0.0
        %vm2752 = vcmp.ge.f32.partialorder %v2716, 0.0
        %vm2753 = vcmp.ge.f32.partialorder %v2718, 0.0
        %vm2754 = vcmp.ge.f32.partialorder %v2720, 0.0
        %v2755 = vstv %s2722
        %v2756 = vmul.f32 %v2755, %v2644
        %v2757 = vmul.f32 %v2755, %v2646
        %v2758 = vmul.f32 %v2755, %v2648
        %v2759 = vmul.f32 %v2755, %v2650
        %v2760 = vmul.f32 %v2755, %v2654
        %v2761 = vmul.f32 %v2755, %v2656
        %v2762 = vmul.f32 %v2755, %v2658
        %v2763 = vmul.f32 %v2755, %v2660
        %v2764 = vmul.f32 %v2755, %v2664
        %v2765 = vmul.f32 %v2755, %v2666
        %v2766 = vmul.f32 %v2755, %v2668
        %v2767 = vmul.f32 %v2755, %v2670
        %v2768 = vmul.f32 %v2755, %v2674
        %v2769 = vmul.f32 %v2755, %v2676
        %v2770 = vmul.f32 %v2755, %v2678
        %v2771 = vmul.f32 %v2755, %v2680
        %v2772 = vmul.f32 %v2755, %v2684
        %v2773 = vmul.f32 %v2755, %v2686
        %v2774 = vmul.f32 %v2755, %v2688
        %v2775 = vmul.f32 %v2755, %v2690
        %v2776 = vmul.f32 %v2755, %v2694
        %v2777 = vmul.f32 %v2755, %v2696
        %v2778 = vmul.f32 %v2755, %v2698
        %v2779 = vmul.f32 %v2755, %v2700
        %v2780 = vmul.f32 %v2755, %v2704
        %v2781 = vmul.f32 %v2755, %v2706
        %v2782 = vmul.f32 %v2755, %v2708
        %v2783 = vmul.f32 %v2755, %v2710
        %v2784 = vmul.f32 %v2755, %v2714
        %v2785 = vmul.f32 %v2755, %v2716
        %v2786 = vmul.f32 %v2755, %v2718
        %v2787 = vmul.f32 %v2755, %v2720
        %v2788 = vsel %vm2723, %v2644, %v2756
        %v2789 = vsel %vm2724, %v2646, %v2757
        %v2790 = vsel %vm2725, %v2648, %v2758
        %v2791 = vsel %vm2726, %v2650, %v2759
        %v2792 = vsel %vm2727, %v2654, %v2760
        %v2793 = vsel %vm2728, %v2656, %v2761
        %v2794 = vsel %vm2729, %v2658, %v2762
        %v2795 = vsel %vm2730, %v2660, %v2763
        %v2796 = vsel %vm2731, %v2664, %v2764
        %v2797 = vsel %vm2732, %v2666, %v2765
        %v2798 = vsel %vm2733, %v2668, %v2766
        %v2799 = vsel %vm2734, %v2670, %v2767
        %v2800 = vsel %vm2735, %v2674, %v2768
        %v2801 = vsel %vm2736, %v2676, %v2769
        %v2802 = vsel %vm2737, %v2678, %v2770
        %v2803 = vsel %vm2738, %v2680, %v2771
        %v2804 = vsel %vm2739, %v2684, %v2772
        %v2805 = vsel %vm2740, %v2686, %v2773
        %v2806 = vsel %vm2741, %v2688, %v2774
        %v2807 = vsel %vm2742, %v2690, %v2775
        %v2808 = vsel %vm2743, %v2694, %v2776
        %v2809 = vsel %vm2744, %v2696, %v2777
        %v2810 = vsel %vm2745, %v2698, %v2778
        %v2811 = vsel %vm2746, %v2700, %v2779
        %v2812 = vsel %vm2747, %v2704, %v2780
        %v2813 = vsel %vm2748, %v2706, %v2781
        %v2814 = vsel %vm2749, %v2708, %v2782
        %v2815 = vsel %vm2750, %v2710, %v2783
        %v2816 = vsel %vm2751, %v2714, %v2784
        %v2817 = vsel %vm2752, %v2716, %v2785
        %v2818 = vsel %vm2753, %v2718, %v2786
        %v2819 = vsel %vm2754, %v2720, %v2787
        %2820 = vst [vmem:[%s235] sm:$0xff] %v2788
        %2821 = vst [vmem:[%s235 + $0x8] sm:$0xff] %v2789
        %2822 = vst [vmem:[%s235 + $0x10] sm:$0xff] %v2790
        %2823 = vst [vmem:[%s235 + $0x18] sm:$0xff] %v2791
        %2824 = vst [vmem:[%s235 + $0x20] sm:$0xff] %v2792
        %2825 = vst [vmem:[%s235 + $0x28] sm:$0xff] %v2793
        %2826 = vst [vmem:[%s235 + $0x30] sm:$0xff] %v2794
        %2827 = vst [vmem:[%s235 + $0x38] sm:$0xff] %v2795
        %2828 = vst [vmem:[%s235 + $0x40] sm:$0xff] %v2796
        %2829 = vst [vmem:[%s235 + $0x48] sm:$0xff] %v2797
        %2830 = vst [vmem:[%s235 + $0x50] sm:$0xff] %v2798
        %2831 = vst [vmem:[%s235 + $0x58] sm:$0xff] %v2799
        %2832 = vst [vmem:[%s235 + $0x60] sm:$0xff] %v2800
        %2833 = vst [vmem:[%s235 + $0x68] sm:$0xff] %v2801
        %2834 = vst [vmem:[%s235 + $0x70] sm:$0xff] %v2802
        %2835 = vst [vmem:[%s235 + $0x78] sm:$0xff] %v2803
        %2836 = vst [vmem:[%s235 + $0x80] sm:$0xff] %v2804
        %2837 = vst [vmem:[%s235 + $0x88] sm:$0xff] %v2805
        %2838 = vst [vmem:[%s235 + $0x90] sm:$0xff] %v2806
        %2839 = vst [vmem:[%s235 + $0x98] sm:$0xff] %v2807
        %2840 = vst [vmem:[%s235 + $0xa0] sm:$0xff] %v2808
        %2841 = vst [vmem:[%s235 + $0xa8] sm:$0xff] %v2809
        %2842 = vst [vmem:[%s235 + $0xb0] sm:$0xff] %v2810
        %2843 = vst [vmem:[%s235 + $0xb8] sm:$0xff] %v2811
        %2844 = vst [vmem:[%s235 + $0xc0] sm:$0xff] %v2812
        %2845 = vst [vmem:[%s235 + $0xc8] sm:$0xff] %v2813
        %2846 = vst [vmem:[%s235 + $0xd0] sm:$0xff] %v2814
        %2847 = vst [vmem:[%s235 + $0xd8] sm:$0xff] %v2815
        %2848 = vst [vmem:[%s235 + $0xe0] sm:$0xff] %v2816
        %2849 = vst [vmem:[%s235 + $0xe8] sm:$0xff] %v2817
        %2850 = vst [vmem:[%s235 + $0xf0] sm:$0xff] %v2818
        %2851 = vst [vmem:[%s235 + $0xf8] sm:$0xff] %v2819
        %s2852 = smul.u32 16, %s22
        %p2853 = scmp.lt.s32.totalorder %s21, 1
        %s2854 = scalar_select %p2853, %s21, 1
        %p2855 = scmp.lt.s32.totalorder %s2852, 31
        %s2856 = scalar_select %p2855, %s2852, 31
        %s2857 = smul.addr %s2856, 2
        %s2858 = smul.addr %s2854, 64
        %s2859 = sadd.s32 %s2857, %s2858
        %s2860 = smul.addr %s2859, 8
        %s2861 = scalar_lea.vmem %s4, %s2860
        // Predicated region
        $region41: #{upsampling_block_forward.1} parent=35 // pred_check
          %p2862 = pneg %p138
        $region42: #{upsampling_block_forward.1} parent=35 // pred_check_branch
          %2864 = sbr.rel (%p2862) target = $region44
        $region43: #{upsampling_block_forward.1} parent=35 // pred_region
          %s2865 = smul.u32 16, %s22
        $region44: #{upsampling_block_forward.1} parent=35 // pred_fallthru
          _
      $region36: #{upsampling_block_forward.1} parent=5 // pred_fallthru
        _
      %p2866 = scmp.le.s32.totalorder 2, %s12
      // Predicated region
      $region45: #{upsampling_block_forward.1} parent=5 // pred_check
        %p2867 = pneg %p2866
      $region46: #{upsampling_block_forward.1} parent=5 // pred_check_branch
        %2869 = sbr.rel (%p2867) target = $region48
      $region47: #{upsampling_block_forward.1} parent=5 // pred_region
        %s2870 = ssub.s32 %s12, 2
        // Predicated region
        $region49: #{upsampling_block_forward.1} parent=47 // pred_check
          %p2871 = pneg %p144
        $region50: #{upsampling_block_forward.1} parent=47 // pred_check_branch
          %2873 = sbr.rel (%p2871) target = $region52
        $region51: #{upsampling_block_forward.1} parent=47 // pred_region
          %s2874 = smul.u32 16, %s24
          %p2875 = scmp.lt.s32.totalorder %s23, 1
          %s2876 = scalar_select %p2875, %s23, 1
          %p2877 = scmp.lt.s32.totalorder %s2874, 31
          %s2878 = scalar_select %p2877, %s2874, 31
          %s2879 = smul.addr %s2878, 2
          %s2880 = smul.addr %s2876, 64
          %s2881 = sadd.s32 %s2879, %s2880
          %s2882 = smul.addr %s2881, 8
          %s2883 = scalar_lea.vmem %s4, %s2882
        $region52: #{upsampling_block_forward.1} parent=47 // pred_fallthru
          _
      $region48: #{upsampling_block_forward.1} parent=5 // pred_fallthru
        _
    $region6: #{upsampling_block_forward.1} parent=1 // loop_footer
      %s16 = sadd.s32 1, %s12
    $region7: #{upsampling_block_forward.1} parent=1 // loop_footer_branch
      %11 = sbr.rel target = $region3
    $region8: #{upsampling_block_forward.1} parent=1 // loop_exit
      _
    %2884 = vsyncpa [#allocation5], 1
    %s2885 = scalar_lea.sflag [#allocation5], 1
    %2886 = vsyncpa %s2885, 1

</llo_original>
